<compile_context>
chip_gen: v5e
topology: v5e:2x2
jax: 0.10.0
libtpu: 0.0.40
codegen_flags: <defaults>
</compile_context>

<pallas_src>
import functools
import math

import jax
import jax.numpy as jnp
from jax.experimental import pallas as pl
from jax.experimental.pallas import tpu as pltpu

_LN_EPS = 1e-5                   # torch.nn.LayerNorm default eps
_MATMUL_DTYPE = jnp.bfloat16     # MXU input dtype (accumulate in f32)
_APPROX_RECIP = True             # set False for tight-tolerance validation runs


# ---------------------------------------------------------------------------
# Generation-aware VMEM budget and tiling helpers
# ---------------------------------------------------------------------------
@functools.lru_cache(maxsize=None)
def _vmem_limit_bytes():
    """~75% of this chip's VMEM (v5e/v6e: 96 MiB, v7x: 48 MiB), capped at 96 MiB."""
    try:
        cap = int(pltpu.get_tpu_info().vmem_capacity_bytes)
    except Exception:  # pragma: no cover - conservative fallback off-TPU
        cap = 64 * 1024 * 1024
    return int(min(cap * 3 // 4, 96 * 1024 * 1024))


def _pick_row_tile(n_rows, bytes_per_row, budget_bytes, prefer_multi=False):
    """Largest 8-aligned divisor of n_rows within the byte budget.

    If prefer_multi, cap so the grid has >= 2 steps (keeps both v7x
    TensorCores busy on 'parallel' axes).  Falls back to the full extent
    (always a legal block shape) when no aligned divisor exists.
    """
    cap = max(8, budget_bytes // max(1, bytes_per_row))
    if prefer_multi and n_rows >= 16:
        cap = min(cap, n_rows // 2)
    t = (min(n_rows, cap) // 8) * 8
    while t >= 8:
        if n_rows % t == 0:
            return t
        t -= 8
    return n_rows


def _chunk(total, pref, align):
    """Largest chunk <= pref dividing total and a multiple of align."""
    if total <= pref:
        return total
    start = pref - (pref % align)
    for t in range(start, align - 1, -align):
        if total % t == 0:
            return t
    return total


def _layernorm(x, gamma, beta):
    mean = jnp.mean(x, axis=-1, keepdims=True)
    xc = x - mean
    var = jnp.mean(xc * xc, axis=-1, keepdims=True)
    return xc * jax.lax.rsqrt(var + _LN_EPS) * gamma + beta


def _gelu_exact(x):
    # Exact (erf) GELU to match torch.nn.GELU; tanh approx would route to the
    # EUP on v5e but deviates slightly from the reference.
    return 0.5 * x * (1.0 + jax.lax.erf(x * (1.0 / math.sqrt(2.0))))


# ---------------------------------------------------------------------------
# Kernel 1: encode cross-attention (single shared latent query over N tokens)
# ---------------------------------------------------------------------------
def _encode_ca_kernel(x_ref, wq_eff_ref, wv_ref, expand_ref, wo_ref, bo_ref,
                      o_ref, *, n_key, n_head, d_head):
    rows = x_ref.shape[0]
    tb = rows // n_key
    d_hidden = n_head * d_head

    xf = x_ref[...]                                         # (tb*N, d_input) bf16

    # sim[b*n, h] = q_h . k_h : the K projection is pre-folded into wq_eff,
    # so this is one (tb*N, d_in) x (d_in, H) matmul, heads fused on lanes.
    sim = jnp.dot(xf, wq_eff_ref[...], preferred_element_type=jnp.float32)
    sim = sim.reshape(tb, n_key, n_head) * (1.0 / (d_head ** 0.5))

    m = jnp.max(sim, axis=1, keepdims=True)                 # softmax over keys
    p = jnp.exp(sim - m)
    den = jnp.sum(p, axis=1, keepdims=True)
    if _APPROX_RECIP:
        attn = p * pl.reciprocal(den, approx=True)
    else:
        attn = p / den

    v = jnp.dot(xf, wv_ref[...], preferred_element_type=jnp.float32)

    # Broadcast per-head weights to the fused (h*d_head) lane layout with a
    # one-hot bf16 matmul, then attention-weighted sum over the N keys.
    attn_e = jnp.dot(attn.reshape(tb * n_key, n_head).astype(expand_ref.dtype),
                     expand_ref[...], preferred_element_type=jnp.float32)
    ctx = jnp.sum((attn_e * v).reshape(tb, n_key, d_hidden), axis=1)

    out = jnp.dot(ctx.astype(wo_ref.dtype), wo_ref[...],
                  preferred_element_type=jnp.float32) + bo_ref[...]
    o_ref[...] = out.astype(o_ref.dtype)


def encode_ca(x, wq_eff, wv, expand, wo, bo, *, n_head, d_head,
              matmul_dtype=_MATMUL_DTYPE):
    B, N, d_in = x.shape
    d_hidden, d_latent = wo.shape
    mdt = matmul_dtype
    vmem_limit = _vmem_limit_bytes()

    # Byte-sized x block for this HBM-stream kernel (~1/16 of budget per
    # double-buffered input block); >= 2 grid steps when B allows (v7x).
    tb = _pick_row_tile(B, N * d_in * 2 + d_latent * 4,
                        vmem_limit // 16, prefer_multi=True)

    # Flatten (B, N, d_in) -> (B*N, d_in) so every grid step feeds tb*N rows
    # straight into the MXU M dimension.
    x_flat = x.reshape(B * N, d_in).astype(mdt)
    kernel = functools.partial(_encode_ca_kernel, n_key=N, n_head=n_head,
                               d_head=d_head)
    return pl.pallas_call(
        kernel,
        out_shape=jax.ShapeDtypeStruct((B, d_latent), jnp.float32),
        grid=(B // tb,),
        in_specs=[
            pl.BlockSpec((tb * N, d_in), lambda i: (i, 0)),
            pl.BlockSpec((d_in, n_head), lambda i: (0, 0)),      # Wq_eff (folded)
            pl.BlockSpec((d_in, d_hidden), lambda i: (0, 0)),    # Wv
            pl.BlockSpec((n_head, d_hidden), lambda i: (0, 0)),  # one-hot expand
            pl.BlockSpec((d_hidden, d_latent), lambda i: (0, 0)),
            pl.BlockSpec((1, d_latent), lambda i: (0, 0)),
        ],
        out_specs=pl.BlockSpec((tb, d_latent), lambda i: (i, 0)),
        compiler_params=pltpu.CompilerParams(
            dimension_semantics=("parallel",),
            vmem_limit_bytes=vmem_limit),
    )(x_flat, wq_eff.astype(mdt), wv.astype(mdt), expand.astype(mdt),
      wo.astype(mdt), bo.reshape(1, d_latent).astype(jnp.float32))


# ---------------------------------------------------------------------------
# Kernel 2: encodeCANorm -> x + FeedForward(x) -> encodeFFNorm -> (folded
#           processSA^L + decodeCA affine map), fused.  ff hidden tiled with a
#           VMEM f32 accumulator; LayerNorms hoisted out of the chunk loop.
# ---------------------------------------------------------------------------
def _encode_post_decode_kernel(x_ref, ca_g_ref, ca_b_ref, ff_g_ref, ff_b_ref,
                               w1_ref, b1_ref, w2_ref, b2_ref, fn_g_ref,
                               fn_b_ref, a_ref, ab_ref, o_ref,
                               xn_ref, yl_ref, acc_ref):
    c = pl.program_id(1)   # hidden-chunk axis (innermost, "arbitrary")

    @pl.when(c == 0)
    def _():
        # Compute both LayerNorms ONCE per row tile, cache in VMEM scratch.
        x = x_ref[...]
        xn = _layernorm(x, ca_g_ref[...], ca_b_ref[...])           # encodeCANorm
        xn_ref[...] = xn
        yl_ref[...] = _layernorm(xn, ff_g_ref[...],
                                 ff_b_ref[...]).astype(yl_ref.dtype)  # FF LN (bf16)
        acc_ref[...] = jnp.zeros_like(acc_ref)

    hcol = jnp.dot(yl_ref[...], w1_ref[...],
                   preferred_element_type=jnp.float32) + b1_ref[...]
    hcol = _gelu_exact(hcol)
    acc_ref[...] += jnp.dot(hcol.astype(w2_ref.dtype), w2_ref[...],
                            preferred_element_type=jnp.float32)

    @pl.when(c == pl.num_programs(1) - 1)
    def _():
        y = acc_ref[...] + b2_ref[...]
        h = _layernorm(xn_ref[...] + y, fn_g_ref[...], fn_b_ref[...])
        # Folded processSA^L + decodeCA: one (tb, d_latent) x (d_latent, d_out_pad)
        # matmul + bias; the output last dim is a lane-dense multiple of 128.
        out = jnp.dot(h.astype(a_ref.dtype), a_ref[...],
                      preferred_element_type=jnp.float32) + ab_ref[...]
        o_ref[...] = out.astype(o_ref.dtype)


def encode_post_decode(h, p, a_mat, a_bias, *, matmul_dtype=_MATMUL_DTYPE):
    B, d_latent = h.shape
    ff_hidden = p['ff_w1'].shape[1]
    d_out = a_mat.shape[1]
    d_out_pad = ((d_out + 127) // 128) * 128     # lane-dense final store
    mdt = matmul_dtype
    vmem_limit = _vmem_limit_bytes()

    # Row tile: cover the WHOLE batch whenever it fits so the ff weights are
    # streamed from HBM exactly once (they dominate traffic at 4*d_latent^3 B).
    row_bytes = (4 * d_latent + d_out_pad) * 4
    if B * row_bytes <= vmem_limit // 4:
        tb = B
    else:
        tb = _pick_row_tile(B, row_bytes, vmem_limit // 4)

    # Hidden chunk: largest 128-aligned divisor whose double-buffered w1+w2
    # chunks fit ~half the VMEM budget (bigger chunks -> fewer ~0.35us steps,
    # larger weight DMAs closer to the HBM roofline).
    th_pref = max(128, ((vmem_limit // 2) // (8 * max(1, d_latent))) // 128 * 128)
    th = _chunk(ff_hidden, min(th_pref, ff_hidden), 128)

    a_pad = jnp.pad(a_mat, ((0, 0), (0, d_out_pad - d_out)))
    b_pad = jnp.pad(a_bias.reshape(1, d_out), ((0, 0), (0, d_out_pad - d_out)))

    out = pl.pallas_call(
        _encode_post_decode_kernel,
        out_shape=jax.ShapeDtypeStruct((B, d_out_pad), jnp.float32),
        grid=(B // tb, ff_hidden // th),
        in_specs=[
            pl.BlockSpec((tb, d_latent), lambda i, c: (i, 0)),      # x
            pl.BlockSpec((1, d_latent), lambda i, c: (0, 0)),       # ca_norm_g
            pl.BlockSpec((1, d_latent), lambda i, c: (0, 0)),       # ca_norm_b
            pl.BlockSpec((1, d_latent), lambda i, c: (0, 0)),       # ff_ln_g
            pl.BlockSpec((1, d_latent), lambda i, c: (0, 0)),       # ff_ln_b
            pl.BlockSpec((d_latent, th), lambda i, c: (0, c)),      # ff_w1 chunk
            pl.BlockSpec((1, th), lambda i, c: (0, c)),             # ff_b1 chunk
            pl.BlockSpec((th, d_latent), lambda i, c: (c, 0)),      # ff_w2 chunk
            pl.BlockSpec((1, d_latent), lambda i, c: (0, 0)),       # ff_b2
            pl.BlockSpec((1, d_latent), lambda i, c: (0, 0)),       # ff_norm_g
            pl.BlockSpec((1, d_latent), lambda i, c: (0, 0)),       # ff_norm_b
            pl.BlockSpec((d_latent, d_out_pad), lambda i, c: (0, 0)),  # folded A
            pl.BlockSpec((1, d_out_pad), lambda i, c: (0, 0)),         # folded bias
        ],
        out_specs=pl.BlockSpec((tb, d_out_pad), lambda i, c: (i, 0)),
        scratch_shapes=[pltpu.VMEM((tb, d_latent), jnp.float32),   # xn (residual)
                        pltpu.VMEM((tb, d_latent), mdt),           # yl (matmul LHS)
                        pltpu.VMEM((tb, d_latent), jnp.float32)],  # ff accumulator
        compiler_params=pltpu.CompilerParams(
            dimension_semantics=("parallel", "arbitrary"),
            vmem_limit_bytes=vmem_limit),
    )(h, p['ca_norm_g'], p['ca_norm_b'], p['ff_ln_g'], p['ff_ln_b'],
      p['ff_w1'].astype(mdt), p['ff_b1'], p['ff_w2'].astype(mdt), p['ff_b2'],
      p['ff_norm_g'], p['ff_norm_b'],
      a_pad.astype(mdt), b_pad.astype(jnp.float32))
    return out[:, :d_out]


# ---------------------------------------------------------------------------
# Full PerceiverIO forward
# ---------------------------------------------------------------------------
def perceiver_io_forward(x, params, *, n_head, d_head, n_attn_layers,
                         matmul_dtype=_MATMUL_DTYPE):
    B = x.shape[0]
    d_latent = params['latent'].shape[0]
    d_out = params['out_qry'].shape[0]
    d_hidden = n_head * d_head

    e = params['encodeCA']
    # Single shared (batch-independent) latent query: project it once, then
    # fold the K projection into an effective (d_input, n_head) query matrix
    # so the kernel computes sim = x @ Wq_eff directly (exact f32 fold).
    q_proj = params['latent'] @ e['wq']                              # (H*Dh,)
    head_mask = jax.nn.one_hot(jnp.arange(d_hidden) // d_head, n_head,
                               dtype=jnp.float32)                    # (H*Dh, H)
    qmat = head_mask * q_proj[:, None]                               # (H*Dh, H)
    wq_eff = e['wk'] @ qmat                                          # (d_in, H)
    expand = head_mask.T                                             # (H, H*Dh)

    h = encode_ca(x, wq_eff, e['wv'], expand, e['wo'], e['bo'],
                  n_head=n_head, d_head=d_head, matmul_dtype=matmul_dtype)

    # processSA (n_attn_layers, shared weights) + decodeCA: with a single
    # latent token the softmax is exactly 1, so every layer reduces to the
    # affine map h -> h @ (Wv @ Wo) + bo.  Fold the whole stack + the decode
    # cross-attention into ONE (d_latent, d_out) matrix + bias (exact, f32),
    # applied inside the encode_post_decode epilogue.
    s = params['processSA']
    d = params['decodeCA']
    M = s['wv'] @ s['wo']                                            # (dl, dl)
    A = jnp.eye(d_latent, dtype=jnp.float32)
    b_acc = jnp.zeros((d_latent,), jnp.float32)
    for _ in range(n_attn_layers):
        A = A @ M
        b_acc = b_acc @ M + s['bo']
    D = d['wv'] @ d['wo']                                            # (dl, d_out)
    a_full = A @ D                                                   # (dl, d_out)
    b_full = b_acc @ D + d['bo']                                     # (d_out,)

    out = encode_post_decode(h, params['post'], a_full, b_full,
                             matmul_dtype=matmul_dtype)
    return out.reshape(B, 1, d_out)


# ---------------------------------------------------------------------------
# Pure-JAX reference (full multi-head attention everywhere, f32)
# ---------------------------------------------------------------------------
def _layernorm_ref(x, g, b):
    mean = jnp.mean(x, -1, keepdims=True)
    var = jnp.mean((x - mean) ** 2, -1, keepdims=True)
    return (x - mean) / jnp.sqrt(var + _LN_EPS) * g + b


def _mha_ref(qry, key, val, wq, wk, wv, wo, bo, n_head, d_head):
    B, nq, _ = qry.shape
    q = qry @ wq
    k = key @ wk
    v = val @ wv
    split = lambda t: t.reshape(B, t.shape[1], n_head, d_head).transpose(0, 2, 1, 3)
    qh, kh, vh = split(q), split(k), split(v)
    sim = jnp.einsum('bhid,bhjd->bhij', qh, kh) / (d_head ** 0.5)
    attn = jax.nn.softmax(sim, axis=-1)
    ctx = jnp.einsum('bhij,bhjd->bhid', attn, vh)
    ctx = ctx.transpose(0, 2, 1, 3).reshape(B, nq, n_head * d_head)
    return ctx @ wo + bo


def perceiver_io_reference(x, params, *, n_head, d_head, n_attn_layers):
    B = x.shape[0]
    d_latent = params['latent'].shape[0]
    d_out = params['out_qry'].shape[0]
    latent = jnp.broadcast_to(params['latent'], (B, 1, d_latent))
    out_qry = jnp.broadcast_to(params['out_qry'], (B, 1, d_out))
    e = params['encodeCA']
    h = _mha_ref(latent, x, x, e['wq'], e['wk'], e['wv'], e['wo'], e['bo'],
                 n_head, d_head)
    p = params['post']
    h = _layernorm_ref(h, p['ca_norm_g'], p['ca_norm_b'])
    y = _layernorm_ref(h, p['ff_ln_g'], p['ff_ln_b'])
    y = y @ p['ff_w1'] + p['ff_b1']
    y = 0.5 * y * (1.0 + jax.lax.erf(y / math.sqrt(2.0)))
    y = y @ p['ff_w2'] + p['ff_b2']
    h = h + y
    h = _layernorm_ref(h, p['ff_norm_g'], p['ff_norm_b'])
    s = params['processSA']
    for _ in range(n_attn_layers):
        h = _mha_ref(h, h, h, s['wq'], s['wk'], s['wv'], s['wo'], s['bo'],
                     n_head, d_head)
    d = params['decodeCA']
    return _mha_ref(out_qry, h, h, d['wq'], d['wk'], d['wv'], d['wo'], d['bo'],
                    n_head, d_head)


# ---------------------------------------------------------------------------
# Deterministic parameter init (shapes dictated by PerceiverIO.__init__)
# ---------------------------------------------------------------------------
def init_params(key, d_input, d_latent, d_out, n_head, d_head):
    d_hidden = n_head * d_head
    ff_hidden = d_latent * d_latent   # FeedForward(d_latent, mult=d_latent)
    ks = iter(jax.random.split(key, 32))
    w = lambda shape, s=0.1: (s * jax.random.normal(next(ks), shape)).astype(jnp.float32)

    def mha_p(d_q, d_kv):
        return dict(wq=w((d_q, d_hidden)), wk=w((d_kv, d_hidden)),
                    wv=w((d_kv, d_hidden)), wo=w((d_hidden, d_q)),
                    bo=w((d_q,)))

    return dict(
        latent=jax.random.normal(next(ks), (d_latent,), jnp.float32),
        out_qry=jax.random.normal(next(ks), (d_out,), jnp.float32),
        encodeCA=mha_p(d_latent, d_input),
        processSA=mha_p(d_latent, d_latent),
        decodeCA=mha_p(d_out, d_latent),
        post=dict(
            ca_norm_g=1.0 + w((1, d_latent)), ca_norm_b=w((1, d_latent)),
            ff_ln_g=1.0 + w((1, d_latent)),   ff_ln_b=w((1, d_latent)),
            ff_w1=w((d_latent, ff_hidden)),   ff_b1=w((1, ff_hidden)),
            ff_w2=w((ff_hidden, d_latent)),   ff_b2=w((1, d_latent)),
            ff_norm_g=1.0 + w((1, d_latent)), ff_norm_b=w((1, d_latent)),
        ),
    )


if __name__ == "__main__":
    # Small shapes consistent with the module's forward.
    B, N = 2, 8
    d_input, d_latent, d_out = 32, 32, 16
    n_head, d_head, n_attn_layers = 4, 8, 2

    root = jax.random.PRNGKey(0)
    pkey, xkey = jax.random.split(root)
    params = init_params(pkey, d_input, d_latent, d_out, n_head, d_head)
    x = jax.random.normal(xkey, (B, N, d_input), jnp.float32)

    fwd = jax.jit(functools.partial(perceiver_io_forward, n_head=n_head,
                                    d_head=d_head, n_attn_layers=n_attn_layers))
    out = jax.block_until_ready(fwd(x, params))

    ref = perceiver_io_reference(x, params, n_head=n_head, d_head=d_head,
                                 n_attn_layers=n_attn_layers)
    assert out.shape == (B, 1, d_out), out.shape
    err = float(jnp.max(jnp.abs(out - ref)))
    # bf16 matmul inputs (f32 accumulation) vs f32 reference -> loose tolerance.
    assert err < 5e-2, err
    # TODO(synk): dropout layers (p=0.0) are identity at inference and omitted.
    print("KERNEL_OK")
</pallas_src>

<mosaic_0001>
module attributes {stable_mosaic.version = 11 : i64} {
  func.func @_encode_ca_kernel(%arg0: i32, %arg1: memref<16x32xbf16, #tpu.memory_space<vmem>>, %arg2: memref<32x4xbf16, #tpu.memory_space<vmem>>, %arg3: memref<32x32xbf16, #tpu.memory_space<vmem>>, %arg4: memref<4x32xbf16, #tpu.memory_space<vmem>>, %arg5: memref<32x32xbf16, #tpu.memory_space<vmem>>, %arg6: memref<1x32xf32, #tpu.memory_space<vmem>>, %arg7: memref<2x32xf32, #tpu.memory_space<vmem>>) attributes {dimension_semantics = [#tpu.dimension_semantics<parallel>], iteration_bounds = array<i64: 1>, scalar_prefetch = 0 : i64, scratch_operands = 0 : i64, tpu.core_type = #tpu.core_type<tc>, window_params = [{transform_indices = @transform_0, window_bounds = array<i64: 16, 32>}, {pipeline_mode = #tpu.pipeline_mode<synchronous>, transform_indices = @transform_1, window_bounds = array<i64: 32, 4>}, {pipeline_mode = #tpu.pipeline_mode<synchronous>, transform_indices = @transform_2, window_bounds = array<i64: 32, 32>}, {pipeline_mode = #tpu.pipeline_mode<synchronous>, transform_indices = @transform_3, window_bounds = array<i64: 4, 32>}, {pipeline_mode = #tpu.pipeline_mode<synchronous>, transform_indices = @transform_4, window_bounds = array<i64: 32, 32>}, {pipeline_mode = #tpu.pipeline_mode<synchronous>, transform_indices = @transform_5, window_bounds = array<i64: 1, 32>}, {transform_indices = @transform_6, window_bounds = array<i64: 2, 32>}]} {
    %c0 = arith.constant 0 : index
    %c0_0 = arith.constant 0 : index
    %0 = vector.load %arg1[%c0, %c0_0] : memref<16x32xbf16, #tpu.memory_space<vmem>>, vector<16x32xbf16>
    %c0_1 = arith.constant 0 : index
    %c0_2 = arith.constant 0 : index
    %1 = vector.load %arg2[%c0_1, %c0_2] : memref<32x4xbf16, #tpu.memory_space<vmem>>, vector<32x4xbf16>
    %cst = arith.constant dense<0.000000e+00> : vector<16x4xf32>
    %2 = tpu.matmul %0, %1, %cst {dimension_numbers = #tpu.dot_dimension_numbers<[1], [0], [0], [1], [0, 0, 1, 1], [], []>} : vector<16x32xbf16>, vector<32x4xbf16>, vector<16x4xf32> -> vector<16x4xf32>
    %3 = vector.shape_cast %2 : vector<16x4xf32> to vector<2x8x4xf32>
    %cst_3 = arith.constant 0.353553385 : f32
    %4 = vector.broadcast %cst_3 : f32 to vector<2x8x4xf32>
    %5 = arith.mulf %3, %4 : vector<2x8x4xf32>
    %cst_4 = arith.constant dense<0xFF800000> : vector<2x4xf32>
    %6 = vector.multi_reduction <maximumf>, %5, %cst_4 [1] : vector<2x8x4xf32> to vector<2x4xf32>
    %7 = vector.shape_cast %6 : vector<2x4xf32> to vector<2x1x4xf32>
    %8 = vector.broadcast %7 : vector<2x1x4xf32> to vector<2x8x4xf32>
    %9 = arith.subf %5, %8 : vector<2x8x4xf32>
    %10 = math.exp %9 : vector<2x8x4xf32>
    %cst_5 = arith.constant dense<0.000000e+00> : vector<2x4xf32>
    %11 = vector.multi_reduction <add>, %10, %cst_5 [1] : vector<2x8x4xf32> to vector<2x4xf32>
    %12 = vector.shape_cast %11 : vector<2x4xf32> to vector<2x1x4xf32>
    %13 = tpu.reciprocal %12 {approx = true} : vector<2x1x4xf32> -> vector<2x1x4xf32>
    %14 = vector.broadcast %13 : vector<2x1x4xf32> to vector<2x8x4xf32>
    %15 = arith.mulf %10, %14 : vector<2x8x4xf32>
    %c0_6 = arith.constant 0 : index
    %c0_7 = arith.constant 0 : index
    %16 = vector.load %arg3[%c0_6, %c0_7] : memref<32x32xbf16, #tpu.memory_space<vmem>>, vector<32x32xbf16>
    %cst_8 = arith.constant dense<0.000000e+00> : vector<16x32xf32>
    %17 = tpu.matmul %0, %16, %cst_8 {dimension_numbers = #tpu.dot_dimension_numbers<[1], [0], [0], [1], [0, 0, 1, 1], [], []>} : vector<16x32xbf16>, vector<32x32xbf16>, vector<16x32xf32> -> vector<16x32xf32>
    %18 = vector.shape_cast %15 : vector<2x8x4xf32> to vector<16x4xf32>
    %19 = arith.truncf %18 : vector<16x4xf32> to vector<16x4xbf16>
    %c0_9 = arith.constant 0 : index
    %c0_10 = arith.constant 0 : index
    %20 = vector.load %arg4[%c0_9, %c0_10] : memref<4x32xbf16, #tpu.memory_space<vmem>>, vector<4x32xbf16>
    %cst_11 = arith.constant dense<0.000000e+00> : vector<16x32xf32>
    %21 = tpu.matmul %19, %20, %cst_11 {dimension_numbers = #tpu.dot_dimension_numbers<[1], [0], [0], [1], [0, 0, 1, 1], [], []>} : vector<16x4xbf16>, vector<4x32xbf16>, vector<16x32xf32> -> vector<16x32xf32>
    %22 = arith.mulf %21, %17 : vector<16x32xf32>
    %23 = vector.shape_cast %22 : vector<16x32xf32> to vector<2x8x32xf32>
    %cst_12 = arith.constant dense<0.000000e+00> : vector<2x32xf32>
    %24 = vector.multi_reduction <add>, %23, %cst_12 [1] : vector<2x8x32xf32> to vector<2x32xf32>
    %25 = arith.truncf %24 : vector<2x32xf32> to vector<2x32xbf16>
    %c0_13 = arith.constant 0 : index
    %c0_14 = arith.constant 0 : index
    %26 = vector.load %arg5[%c0_13, %c0_14] : memref<32x32xbf16, #tpu.memory_space<vmem>>, vector<32x32xbf16>
    %cst_15 = arith.constant dense<0.000000e+00> : vector<2x32xf32>
    %27 = tpu.matmul %25, %26, %cst_15 {dimension_numbers = #tpu.dot_dimension_numbers<[1], [0], [0], [1], [0, 0, 1, 1], [], []>} : vector<2x32xbf16>, vector<32x32xbf16>, vector<2x32xf32> -> vector<2x32xf32>
    %c0_16 = arith.constant 0 : index
    %c0_17 = arith.constant 0 : index
    %28 = vector.load %arg6[%c0_16, %c0_17] : memref<1x32xf32, #tpu.memory_space<vmem>>, vector<1x32xf32>
    %29 = vector.broadcast %28 : vector<1x32xf32> to vector<2x32xf32>
    %30 = arith.addf %27, %29 : vector<2x32xf32>
    %c0_18 = arith.constant 0 : index
    %c0_19 = arith.constant 0 : index
    %31 = vector.load %arg7[%c0_18, %c0_19] : memref<2x32xf32, #tpu.memory_space<vmem>>, vector<2x32xf32>
    tpu.vector_store %arg7[%c0_18, %c0_19], %30 {strides = array<i32>} : memref<2x32xf32, #tpu.memory_space<vmem>>, vector<2x32xf32>,
    return
  }
  func.func @transform_0(%arg0: i32) -> (i32, i32) {
    %c0_i32 = arith.constant 0 : i32
    %c0_i32_0 = arith.constant 0 : i32
    return %arg0, %c0_i32 : i32, i32
  }
  func.func @transform_1(%arg0: i32) -> (i32, i32) {
    %c0_i32 = arith.constant 0 : i32
    %c0_i32_0 = arith.constant 0 : i32
    %c0_i32_1 = arith.constant 0 : i32
    return %c0_i32, %c0_i32_0 : i32, i32
  }
  func.func @transform_2(%arg0: i32) -> (i32, i32) {
    %c0_i32 = arith.constant 0 : i32
    %c0_i32_0 = arith.constant 0 : i32
    %c0_i32_1 = arith.constant 0 : i32
    return %c0_i32, %c0_i32_0 : i32, i32
  }
  func.func @transform_3(%arg0: i32) -> (i32, i32) {
    %c0_i32 = arith.constant 0 : i32
    %c0_i32_0 = arith.constant 0 : i32
    %c0_i32_1 = arith.constant 0 : i32
    return %c0_i32, %c0_i32_0 : i32, i32
  }
  func.func @transform_4(%arg0: i32) -> (i32, i32) {
    %c0_i32 = arith.constant 0 : i32
    %c0_i32_0 = arith.constant 0 : i32
    %c0_i32_1 = arith.constant 0 : i32
    return %c0_i32, %c0_i32_0 : i32, i32
  }
  func.func @transform_5(%arg0: i32) -> (i32, i32) {
    %c0_i32 = arith.constant 0 : i32
    %c0_i32_0 = arith.constant 0 : i32
    %c0_i32_1 = arith.constant 0 : i32
    return %c0_i32, %c0_i32_0 : i32, i32
  }
  func.func @transform_6(%arg0: i32) -> (i32, i32) {
    %c0_i32 = arith.constant 0 : i32
    %c0_i32_0 = arith.constant 0 : i32
    return %arg0, %c0_i32 : i32, i32
  }
}

module attributes {stable_mosaic.version = 11 : i64} {
  func.func @_encode_post_decode_kernel(%arg0: i32, %arg1: i32, %arg2: memref<2x32xf32, #tpu.memory_space<vmem>>, %arg3: memref<1x32xf32, #tpu.memory_space<vmem>>, %arg4: memref<1x32xf32, #tpu.memory_space<vmem>>, %arg5: memref<1x32xf32, #tpu.memory_space<vmem>>, %arg6: memref<1x32xf32, #tpu.memory_space<vmem>>, %arg7: memref<32x1024xbf16, #tpu.memory_space<vmem>>, %arg8: memref<1x1024xf32, #tpu.memory_space<vmem>>, %arg9: memref<1024x32xbf16, #tpu.memory_space<vmem>>, %arg10: memref<1x32xf32, #tpu.memory_space<vmem>>, %arg11: memref<1x32xf32, #tpu.memory_space<vmem>>, %arg12: memref<1x32xf32, #tpu.memory_space<vmem>>, %arg13: memref<32x128xbf16, #tpu.memory_space<vmem>>, %arg14: memref<1x128xf32, #tpu.memory_space<vmem>>, %arg15: memref<2x128xf32, #tpu.memory_space<vmem>>, %arg16: memref<2x32xf32, #tpu.memory_space<vmem>>, %arg17: memref<2x32xbf16, #tpu.memory_space<vmem>>, %arg18: memref<2x32xf32, #tpu.memory_space<vmem>>) attributes {dimension_semantics = [#tpu.dimension_semantics<parallel>, #tpu.dimension_semantics<arbitrary>], iteration_bounds = array<i64: 1, 1>, scalar_prefetch = 0 : i64, scratch_operands = 3 : i64, tpu.core_type = #tpu.core_type<tc>, window_params = [{transform_indices = @transform_0, window_bounds = array<i64: 2, 32>}, {pipeline_mode = #tpu.pipeline_mode<synchronous>, transform_indices = @transform_1, window_bounds = array<i64: 1, 32>}, {pipeline_mode = #tpu.pipeline_mode<synchronous>, transform_indices = @transform_2, window_bounds = array<i64: 1, 32>}, {pipeline_mode = #tpu.pipeline_mode<synchronous>, transform_indices = @transform_3, window_bounds = array<i64: 1, 32>}, {pipeline_mode = #tpu.pipeline_mode<synchronous>, transform_indices = @transform_4, window_bounds = array<i64: 1, 32>}, {transform_indices = @transform_5, window_bounds = array<i64: 32, 1024>}, {transform_indices = @transform_6, window_bounds = array<i64: 1, 1024>}, {transform_indices = @transform_7, window_bounds = array<i64: 1024, 32>}, {pipeline_mode = #tpu.pipeline_mode<synchronous>, transform_indices = @transform_8, window_bounds = array<i64: 1, 32>}, {pipeline_mode = #tpu.pipeline_mode<synchronous>, transform_indices = @transform_9, window_bounds = array<i64: 1, 32>}, {pipeline_mode = #tpu.pipeline_mode<synchronous>, transform_indices = @transform_10, window_bounds = array<i64: 1, 32>}, {pipeline_mode = #tpu.pipeline_mode<synchronous>, transform_indices = @transform_11, window_bounds = array<i64: 32, 128>}, {pipeline_mode = #tpu.pipeline_mode<synchronous>, transform_indices = @transform_12, window_bounds = array<i64: 1, 128>}, {transform_indices = @transform_13, window_bounds = array<i64: 2, 128>}]} {
    %c0_i32 = arith.constant 0 : i32
    %0 = arith.cmpi eq, %arg1, %c0_i32 : i32
    %1 = arith.extui %0 : i1 to i32
    %c0_i32_0 = arith.constant 0 : i32
    %2 = arith.cmpi ne, %1, %c0_i32_0 : i32
    scf.if %2 {
      %c0_18 = arith.constant 0 : index
      %c0_19 = arith.constant 0 : index
      %26 = vector.load %arg2[%c0_18, %c0_19] : memref<2x32xf32, #tpu.memory_space<vmem>>, vector<2x32xf32>
      %c0_20 = arith.constant 0 : index
      %c0_21 = arith.constant 0 : index
      %27 = vector.load %arg3[%c0_20, %c0_21] : memref<1x32xf32, #tpu.memory_space<vmem>>, vector<1x32xf32>
      %c0_22 = arith.constant 0 : index
      %c0_23 = arith.constant 0 : index
      %28 = vector.load %arg4[%c0_22, %c0_23] : memref<1x32xf32, #tpu.memory_space<vmem>>, vector<1x32xf32>
      %cst_24 = arith.constant dense<0.000000e+00> : vector<2xf32>
      %29 = vector.multi_reduction <add>, %26, %cst_24 [1] : vector<2x32xf32> to vector<2xf32>
      %30 = vector.shape_cast %29 : vector<2xf32> to vector<2x1xf32>
      %cst_25 = arith.constant 3.200000e+01 : f32
      %31 = vector.broadcast %cst_25 : f32 to vector<2x1xf32>
      %32 = arith.divf %30, %31 : vector<2x1xf32>
      %33 = vector.broadcast %32 : vector<2x1xf32> to vector<2x32xf32>
      %34 = arith.subf %26, %33 : vector<2x32xf32>
      %35 = arith.mulf %34, %34 : vector<2x32xf32>
      %cst_26 = arith.constant dense<0.000000e+00> : vector<2xf32>
      %36 = vector.multi_reduction <add>, %35, %cst_26 [1] : vector<2x32xf32> to vector<2xf32>
      %37 = vector.shape_cast %36 : vector<2xf32> to vector<2x1xf32>
      %cst_27 = arith.constant 3.200000e+01 : f32
      %38 = vector.broadcast %cst_27 : f32 to vector<2x1xf32>
      %39 = arith.divf %37, %38 : vector<2x1xf32>
      %cst_28 = arith.constant 9.99999974E-6 : f32
      %40 = vector.broadcast %cst_28 : f32 to vector<2x1xf32>
      %41 = arith.addf %39, %40 : vector<2x1xf32>
      %42 = math.rsqrt %41 : vector<2x1xf32>
      %43 = vector.broadcast %42 : vector<2x1xf32> to vector<2x32xf32>
      %44 = arith.mulf %34, %43 : vector<2x32xf32>
      %45 = vector.broadcast %27 : vector<1x32xf32> to vector<2x32xf32>
      %46 = arith.mulf %44, %45 : vector<2x32xf32>
      %47 = vector.broadcast %28 : vector<1x32xf32> to vector<2x32xf32>
      %48 = arith.addf %46, %47 : vector<2x32xf32>
      %c0_29 = arith.constant 0 : index
      %c0_30 = arith.constant 0 : index
      %49 = vector.load %arg16[%c0_29, %c0_30] : memref<2x32xf32, #tpu.memory_space<vmem>>, vector<2x32xf32>
      tpu.vector_store %arg16[%c0_29, %c0_30], %48 {strides = array<i32>} : memref<2x32xf32, #tpu.memory_space<vmem>>, vector<2x32xf32>,
      %c0_31 = arith.constant 0 : index
      %c0_32 = arith.constant 0 : index
      %50 = vector.load %arg5[%c0_31, %c0_32] : memref<1x32xf32, #tpu.memory_space<vmem>>, vector<1x32xf32>
      %c0_33 = arith.constant 0 : index
      %c0_34 = arith.constant 0 : index
      %51 = vector.load %arg6[%c0_33, %c0_34] : memref<1x32xf32, #tpu.memory_space<vmem>>, vector<1x32xf32>
      %cst_35 = arith.constant dense<0.000000e+00> : vector<2xf32>
      %52 = vector.multi_reduction <add>, %48, %cst_35 [1] : vector<2x32xf32> to vector<2xf32>
      %53 = vector.shape_cast %52 : vector<2xf32> to vector<2x1xf32>
      %cst_36 = arith.constant 3.200000e+01 : f32
      %54 = vector.broadcast %cst_36 : f32 to vector<2x1xf32>
      %55 = arith.divf %53, %54 : vector<2x1xf32>
      %56 = vector.broadcast %55 : vector<2x1xf32> to vector<2x32xf32>
      %57 = arith.subf %48, %56 : vector<2x32xf32>
      %58 = arith.mulf %57, %57 : vector<2x32xf32>
      %cst_37 = arith.constant dense<0.000000e+00> : vector<2xf32>
      %59 = vector.multi_reduction <add>, %58, %cst_37 [1] : vector<2x32xf32> to vector<2xf32>
      %60 = vector.shape_cast %59 : vector<2xf32> to vector<2x1xf32>
      %cst_38 = arith.constant 3.200000e+01 : f32
      %61 = vector.broadcast %cst_38 : f32 to vector<2x1xf32>
      %62 = arith.divf %60, %61 : vector<2x1xf32>
      %cst_39 = arith.constant 9.99999974E-6 : f32
      %63 = vector.broadcast %cst_39 : f32 to vector<2x1xf32>
      %64 = arith.addf %62, %63 : vector<2x1xf32>
      %65 = math.rsqrt %64 : vector<2x1xf32>
      %66 = vector.broadcast %65 : vector<2x1xf32> to vector<2x32xf32>
      %67 = arith.mulf %57, %66 : vector<2x32xf32>
      %68 = vector.broadcast %50 : vector<1x32xf32> to vector<2x32xf32>
      %69 = arith.mulf %67, %68 : vector<2x32xf32>
      %70 = vector.broadcast %51 : vector<1x32xf32> to vector<2x32xf32>
      %71 = arith.addf %69, %70 : vector<2x32xf32>
      %72 = arith.truncf %71 : vector<2x32xf32> to vector<2x32xbf16>
      %c0_40 = arith.constant 0 : index
      %c0_41 = arith.constant 0 : index
      %73 = vector.load %arg17[%c0_40, %c0_41] : memref<2x32xbf16, #tpu.memory_space<vmem>>, vector<2x32xbf16>
      tpu.vector_store %arg17[%c0_40, %c0_41], %72 {strides = array<i32>} : memref<2x32xbf16, #tpu.memory_space<vmem>>, vector<2x32xbf16>,
      %cst_42 = arith.constant 0.000000e+00 : f32
      %74 = vector.broadcast %cst_42 : f32 to vector<2x32xf32>
      %c0_43 = arith.constant 0 : index
      %c0_44 = arith.constant 0 : index
      %75 = vector.load %arg18[%c0_43, %c0_44] : memref<2x32xf32, #tpu.memory_space<vmem>>, vector<2x32xf32>
      tpu.vector_store %arg18[%c0_43, %c0_44], %74 {strides = array<i32>} : memref<2x32xf32, #tpu.memory_space<vmem>>, vector<2x32xf32>,
    } else {
    }
    %c0 = arith.constant 0 : index
    %c0_1 = arith.constant 0 : index
    %3 = vector.load %arg17[%c0, %c0_1] : memref<2x32xbf16, #tpu.memory_space<vmem>>, vector<2x32xbf16>
    %c0_2 = arith.constant 0 : index
    %c0_3 = arith.constant 0 : index
    %4 = vector.load %arg7[%c0_2, %c0_3] : memref<32x1024xbf16, #tpu.memory_space<vmem>>, vector<32x1024xbf16>
    %cst = arith.constant dense<0.000000e+00> : vector<2x1024xf32>
    %5 = tpu.matmul %3, %4, %cst {dimension_numbers = #tpu.dot_dimension_numbers<[1], [0], [0], [1], [0, 0, 1, 1], [], []>} : vector<2x32xbf16>, vector<32x1024xbf16>, vector<2x1024xf32> -> vector<2x1024xf32>
    %c0_4 = arith.constant 0 : index
    %c0_5 = arith.constant 0 : index
    %6 = vector.load %arg8[%c0_4, %c0_5] : memref<1x1024xf32, #tpu.memory_space<vmem>>, vector<1x1024xf32>
    %7 = vector.broadcast %6 : vector<1x1024xf32> to vector<2x1024xf32>
    %8 = arith.addf %5, %7 : vector<2x1024xf32>
    %cst_6 = arith.constant 5.000000e-01 : f32
    %9 = vector.broadcast %cst_6 : f32 to vector<2x1024xf32>
    %10 = arith.mulf %9, %8 : vector<2x1024xf32>
    %cst_7 = arith.constant 0.707106769 : f32
    %11 = vector.broadcast %cst_7 : f32 to vector<2x1024xf32>
    %12 = arith.mulf %8, %11 : vector<2x1024xf32>
    %13 = math.erf %12 : vector<2x1024xf32>
    %cst_8 = arith.constant 1.000000e+00 : f32
    %14 = vector.broadcast %cst_8 : f32 to vector<2x1024xf32>
    %15 = arith.addf %14, %13 : vector<2x1024xf32>
    %16 = arith.mulf %10, %15 : vector<2x1024xf32>
    %c0_9 = arith.constant 0 : index
    %c0_10 = arith.constant 0 : index
    %17 = vector.load %arg18[%c0_9, %c0_10] : memref<2x32xf32, #tpu.memory_space<vmem>>, vector<2x32xf32>
    %18 = arith.truncf %16 : vector<2x1024xf32> to vector<2x1024xbf16>
    %c0_11 = arith.constant 0 : index
    %c0_12 = arith.constant 0 : index
    %19 = vector.load %arg9[%c0_11, %c0_12] : memref<1024x32xbf16, #tpu.memory_space<vmem>>, vector<1024x32xbf16>
    %cst_13 = arith.constant dense<0.000000e+00> : vector<2x32xf32>
    %20 = tpu.matmul %18, %19, %cst_13 {dimension_numbers = #tpu.dot_dimension_numbers<[1], [0], [0], [1], [0, 0, 1, 1], [], []>} : vector<2x1024xbf16>, vector<1024x32xbf16>, vector<2x32xf32> -> vector<2x32xf32>
    %21 = arith.addf %17, %20 : vector<2x32xf32>
    %c0_14 = arith.constant 0 : index
    %c0_15 = arith.constant 0 : index
    %22 = vector.load %arg18[%c0_14, %c0_15] : memref<2x32xf32, #tpu.memory_space<vmem>>, vector<2x32xf32>
    tpu.vector_store %arg18[%c0_14, %c0_15], %21 {strides = array<i32>} : memref<2x32xf32, #tpu.memory_space<vmem>>, vector<2x32xf32>,
    %c0_i32_16 = arith.constant 0 : i32
    %23 = arith.cmpi eq, %arg1, %c0_i32_16 : i32
    %24 = arith.extui %23 : i1 to i32
    %c0_i32_17 = arith.constant 0 : i32
    %25 = arith.cmpi ne, %24, %c0_i32_17 : i32
    scf.if %25 {
      %c0_18 = arith.constant 0 : index
      %c0_19 = arith.constant 0 : index
      %26 = vector.load %arg18[%c0_18, %c0_19] : memref<2x32xf32, #tpu.memory_space<vmem>>, vector<2x32xf32>
      %c0_20 = arith.constant 0 : index
      %c0_21 = arith.constant 0 : index
      %27 = vector.load %arg10[%c0_20, %c0_21] : memref<1x32xf32, #tpu.memory_space<vmem>>, vector<1x32xf32>
      %28 = vector.broadcast %27 : vector<1x32xf32> to vector<2x32xf32>
      %29 = arith.addf %26, %28 : vector<2x32xf32>
      %c0_22 = arith.constant 0 : index
      %c0_23 = arith.constant 0 : index
      %30 = vector.load %arg16[%c0_22, %c0_23] : memref<2x32xf32, #tpu.memory_space<vmem>>, vector<2x32xf32>
      %31 = arith.addf %30, %29 : vector<2x32xf32>
      %c0_24 = arith.constant 0 : index
      %c0_25 = arith.constant 0 : index
      %32 = vector.load %arg11[%c0_24, %c0_25] : memref<1x32xf32, #tpu.memory_space<vmem>>, vector<1x32xf32>
      %c0_26 = arith.constant 0 : index
      %c0_27 = arith.constant 0 : index
      %33 = vector.load %arg12[%c0_26, %c0_27] : memref<1x32xf32, #tpu.memory_space<vmem>>, vector<1x32xf32>
      %cst_28 = arith.constant dense<0.000000e+00> : vector<2xf32>
      %34 = vector.multi_reduction <add>, %31, %cst_28 [1] : vector<2x32xf32> to vector<2xf32>
      %35 = vector.shape_cast %34 : vector<2xf32> to vector<2x1xf32>
      %cst_29 = arith.constant 3.200000e+01 : f32
      %36 = vector.broadcast %cst_29 : f32 to vector<2x1xf32>
      %37 = arith.divf %35, %36 : vector<2x1xf32>
      %38 = vector.broadcast %37 : vector<2x1xf32> to vector<2x32xf32>
      %39 = arith.subf %31, %38 : vector<2x32xf32>
      %40 = arith.mulf %39, %39 : vector<2x32xf32>
      %cst_30 = arith.constant dense<0.000000e+00> : vector<2xf32>
      %41 = vector.multi_reduction <add>, %40, %cst_30 [1] : vector<2x32xf32> to vector<2xf32>
      %42 = vector.shape_cast %41 : vector<2xf32> to vector<2x1xf32>
      %cst_31 = arith.constant 3.200000e+01 : f32
      %43 = vector.broadcast %cst_31 : f32 to vector<2x1xf32>
      %44 = arith.divf %42, %43 : vector<2x1xf32>
      %cst_32 = arith.constant 9.99999974E-6 : f32
      %45 = vector.broadcast %cst_32 : f32 to vector<2x1xf32>
      %46 = arith.addf %44, %45 : vector<2x1xf32>
      %47 = math.rsqrt %46 : vector<2x1xf32>
      %48 = vector.broadcast %47 : vector<2x1xf32> to vector<2x32xf32>
      %49 = arith.mulf %39, %48 : vector<2x32xf32>
      %50 = vector.broadcast %32 : vector<1x32xf32> to vector<2x32xf32>
      %51 = arith.mulf %49, %50 : vector<2x32xf32>
      %52 = vector.broadcast %33 : vector<1x32xf32> to vector<2x32xf32>
      %53 = arith.addf %51, %52 : vector<2x32xf32>
      %54 = arith.truncf %53 : vector<2x32xf32> to vector<2x32xbf16>
      %c0_33 = arith.constant 0 : index
      %c0_34 = arith.constant 0 : index
      %55 = vector.load %arg13[%c0_33, %c0_34] : memref<32x128xbf16, #tpu.memory_space<vmem>>, vector<32x128xbf16>
      %cst_35 = arith.constant dense<0.000000e+00> : vector<2x128xf32>
      %56 = tpu.matmul %54, %55, %cst_35 {dimension_numbers = #tpu.dot_dimension_numbers<[1], [0], [0], [1], [0, 0, 1, 1], [], []>} : vector<2x32xbf16>, vector<32x128xbf16>, vector<2x128xf32> -> vector<2x128xf32>
      %c0_36 = arith.constant 0 : index
      %c0_37 = arith.constant 0 : index
      %57 = vector.load %arg14[%c0_36, %c0_37] : memref<1x128xf32, #tpu.memory_space<vmem>>, vector<1x128xf32>
      %58 = vector.broadcast %57 : vector<1x128xf32> to vector<2x128xf32>
      %59 = arith.addf %56, %58 : vector<2x128xf32>
      %c0_38 = arith.constant 0 : index
      %c0_39 = arith.constant 0 : index
      %60 = vector.load %arg15[%c0_38, %c0_39] : memref<2x128xf32, #tpu.memory_space<vmem>>, vector<2x128xf32>
      tpu.vector_store %arg15[%c0_38, %c0_39], %59 {strides = array<i32>} : memref<2x128xf32, #tpu.memory_space<vmem>>, vector<2x128xf32>,
    } else {
    }
    return
  }
  func.func @transform_0(%arg0: i32, %arg1: i32) -> (i32, i32) {
    %c0_i32 = arith.constant 0 : i32
    %c0_i32_0 = arith.constant 0 : i32
    return %arg0, %c0_i32 : i32, i32
  }
  func.func @transform_1(%arg0: i32, %arg1: i32) -> (i32, i32) {
    %c0_i32 = arith.constant 0 : i32
    %c0_i32_0 = arith.constant 0 : i32
    %c0_i32_1 = arith.constant 0 : i32
    return %c0_i32, %c0_i32_0 : i32, i32
  }
  func.func @transform_2(%arg0: i32, %arg1: i32) -> (i32, i32) {
    %c0_i32 = arith.constant 0 : i32
    %c0_i32_0 = arith.constant 0 : i32
    %c0_i32_1 = arith.constant 0 : i32
    return %c0_i32, %c0_i32_0 : i32, i32
  }
  func.func @transform_3(%arg0: i32, %arg1: i32) -> (i32, i32) {
    %c0_i32 = arith.constant 0 : i32
    %c0_i32_0 = arith.constant 0 : i32
    %c0_i32_1 = arith.constant 0 : i32
    return %c0_i32, %c0_i32_0 : i32, i32
  }
  func.func @transform_4(%arg0: i32, %arg1: i32) -> (i32, i32) {
    %c0_i32 = arith.constant 0 : i32
    %c0_i32_0 = arith.constant 0 : i32
    %c0_i32_1 = arith.constant 0 : i32
    return %c0_i32, %c0_i32_0 : i32, i32
  }
  func.func @transform_5(%arg0: i32, %arg1: i32) -> (i32, i32) {
    %c0_i32 = arith.constant 0 : i32
    %c0_i32_0 = arith.constant 0 : i32
    return %c0_i32, %arg1 : i32, i32
  }
  func.func @transform_6(%arg0: i32, %arg1: i32) -> (i32, i32) {
    %c0_i32 = arith.constant 0 : i32
    %c0_i32_0 = arith.constant 0 : i32
    return %c0_i32, %arg1 : i32, i32
  }
  func.func @transform_7(%arg0: i32, %arg1: i32) -> (i32, i32) {
    %c0_i32 = arith.constant 0 : i32
    %c0_i32_0 = arith.constant 0 : i32
    return %arg1, %c0_i32 : i32, i32
  }
  func.func @transform_8(%arg0: i32, %arg1: i32) -> (i32, i32) {
    %c0_i32 = arith.constant 0 : i32
    %c0_i32_0 = arith.constant 0 : i32
    %c0_i32_1 = arith.constant 0 : i32
    return %c0_i32, %c0_i32_0 : i32, i32
  }
  func.func @transform_9(%arg0: i32, %arg1: i32) -> (i32, i32) {
    %c0_i32 = arith.constant 0 : i32
    %c0_i32_0 = arith.constant 0 : i32
    %c0_i32_1 = arith.constant 0 : i32
    return %c0_i32, %c0_i32_0 : i32, i32
  }
  func.func @transform_10(%arg0: i32, %arg1: i32) -> (i32, i32) {
    %c0_i32 = arith.constant 0 : i32
    %c0_i32_0 = arith.constant 0 : i32
    %c0_i32_1 = arith.constant 0 : i32
    return %c0_i32, %c0_i32_0 : i32, i32
  }
  func.func @transform_11(%arg0: i32, %arg1: i32) -> (i32, i32) {
    %c0_i32 = arith.constant 0 : i32
    %c0_i32_0 = arith.constant 0 : i32
    %c0_i32_1 = arith.constant 0 : i32
    return %c0_i32, %c0_i32_0 : i32, i32
  }
  func.func @transform_12(%arg0: i32, %arg1: i32) -> (i32, i32) {
    %c0_i32 = arith.constant 0 : i32
    %c0_i32_0 = arith.constant 0 : i32
    %c0_i32_1 = arith.constant 0 : i32
    return %c0_i32, %c0_i32_0 : i32, i32
  }
  func.func @transform_13(%arg0: i32, %arg1: i32) -> (i32, i32) {
    %c0_i32 = arith.constant 0 : i32
    %c0_i32_0 = arith.constant 0 : i32
    return %arg0, %c0_i32 : i32, i32
  }
}

</mosaic_0001>

<llo_original>
// kernel: perceiver_io_forward.2
$region0: #{perceiver_io_forward.2}
  #allocation0 [shape = 'u32[]', space=smem, size = 0x4, offset = 0x4, fixed_abs, tag = 'smem constant byte address 0x4 - core index']
  #allocation1 [shape = 'u32[72,128]{1,0:T(1,128)}', space=vmem, size = 0x9000, scoped, tag = 'internal scratch']
  %s0 = inlined_call_operand.vmem [shape: bf16[16,32], index: 0, kind: input, shape index: {}]
  %s1 = inlined_call_operand.vmem [shape: bf16[32,4], index: 1, kind: input, shape index: {}]
  %s2 = inlined_call_operand.vmem [shape: bf16[32,32], index: 2, kind: input, shape index: {}]
  %s3 = inlined_call_operand.vmem [shape: bf16[4,32], index: 3, kind: input, shape index: {}]
  %s4 = inlined_call_operand.vmem [shape: bf16[32,32], index: 4, kind: input, shape index: {}]
  %s5 = inlined_call_operand.vmem [shape: f32[1,32], index: 5, kind: input, shape index: {}]
  %s6 = inlined_call_operand.vmem [shape: f32[2,32], index: 6, kind: output, shape index: {}]
  %s7 = sld [smem:[#allocation0]]
  $region34: #{perceiver_io_forward.2} parent=0
    _
  %s9 = ssub.s32 1, %s7
  %s10 = scalar_select 0, %s9, %s7
  // Predicated region
  $region2: #{perceiver_io_forward.2} parent=0 // pred_check
    _
  $region3: #{perceiver_io_forward.2} parent=0 // pred_check_branch
    %12 = sbr.rel (0) target = $region5
  $region4: #{perceiver_io_forward.2} parent=0 // pred_region
    _
  $region5: #{perceiver_io_forward.2} parent=0 // pred_fallthru
    _
  // Predicated region
  $region6: #{perceiver_io_forward.2} parent=0 // pred_check
    _
  $region7: #{perceiver_io_forward.2} parent=0 // pred_check_branch
    %14 = sbr.rel (0) target = $region9
  $region8: #{perceiver_io_forward.2} parent=0 // pred_region
    _
  $region9: #{perceiver_io_forward.2} parent=0 // pred_fallthru
    _
  // Predicated region
  $region10: #{perceiver_io_forward.2} parent=0 // pred_check
    _
  $region11: #{perceiver_io_forward.2} parent=0 // pred_check_branch
    %16 = sbr.rel (0) target = $region13
  $region12: #{perceiver_io_forward.2} parent=0 // pred_region
    _
  $region13: #{perceiver_io_forward.2} parent=0 // pred_fallthru
    _
  // Predicated region
  $region14: #{perceiver_io_forward.2} parent=0 // pred_check
    _
  $region15: #{perceiver_io_forward.2} parent=0 // pred_check_branch
    %18 = sbr.rel (0) target = $region17
  $region16: #{perceiver_io_forward.2} parent=0 // pred_region
    _
  $region17: #{perceiver_io_forward.2} parent=0 // pred_fallthru
    _
  // Predicated region
  $region18: #{perceiver_io_forward.2} parent=0 // pred_check
    _
  $region19: #{perceiver_io_forward.2} parent=0 // pred_check_branch
    %20 = sbr.rel (0) target = $region21
  $region20: #{perceiver_io_forward.2} parent=0 // pred_region
    _
  $region21: #{perceiver_io_forward.2} parent=0 // pred_fallthru
    _
  // Predicated region
  $region22: #{perceiver_io_forward.2} parent=0 // pred_check
    _
  $region23: #{perceiver_io_forward.2} parent=0 // pred_check_branch
    %22 = sbr.rel (0) target = $region25
  $region24: #{perceiver_io_forward.2} parent=0 // pred_region
    _
  $region25: #{perceiver_io_forward.2} parent=0 // pred_fallthru
    _
  %v24 = vld [vmem:[%s0] sm:$0xf]
  %v25 = vld [vmem:[%s0 + $0x4] sm:$0xf]
  %v26 = vld [vmem:[%s1] sm:$0xf]
  %v27 = vld [vmem:[%s1 + $0x4] sm:$0xf]
  %v28 = vld [vmem:[%s1 + $0x8] sm:$0xf]
  %v29 = vld [vmem:[%s1 + $0xc] sm:$0xf]
  %v32 = vunpack.c.l.b16 %v24
  %v33 = vunpack.c.l.b16 %v25
  %v34 = vpack.c.b16 %v33, %v32
  %v39 = vunpack.c.l.b16 %v26
  %v40 = vunpack.c.l.b16 %v27
  %v41 = vunpack.c.l.b16 %v28
  %v42 = vunpack.c.l.b16 %v29
  %v43 = vpack.c.b16 %v40, %v39
  %v44 = vpack.c.b16 %v42, %v41
  %vm47 = vcmask 261120
  %v49 = vsel %vm47, %v34, 0
  %51 = vmatpush.bf16.msra.mxu0 0
  %52 = vmatpush.bf16.msra.mxu0 0
  %53 = vmatpush.bf16.msra.mxu0 0
  %54 = vmatpush.bf16.msra.mxu0 0
  %55 = vmatpush.bf16.msra.mxu0 0
  %56 = vmatpush.bf16.msra.mxu0 0
  %57 = vmatpush.bf16.msra.mxu0 %v44
  %58 = vmatpush.bf16.msra.mxu0 %v43
  %59 = vmatmul.bf16.gmra.mxu0 %v49
  %v60 = vpop.f32.mrf.mxu0
  %v61 = vadd.f32 0.0, %v60
  %v62 = vpop.f32.mrf.mxu0
  %v63 = vadd.f32 0.0, %v62
  %64 = vdwg.mxu0
  %v65 = vmul.f32 %v61, 0.35355338
  %v66 = vmul.f32 %v63, 0.35355338
  %vm67 = vcmask 31744
  %v68 = vsel %vm67, %v65, -inf
  %v69 = vrot.slane %v68, 4
  %v70 = vmax.f32 %v68, %v69
  %v71 = vrot.slane %v70, 2
  %v72 = vmax.f32 %v70, %v71
  %v73 = vrot.slane %v72, 1
  %v74 = vmax.f32 %v72, %v73
  %v75 = vsel %vm67, %v66, -inf
  %v76 = vrot.slane %v75, 4
  %v77 = vmax.f32 %v75, %v76
  %v78 = vrot.slane %v77, 2
  %v79 = vmax.f32 %v77, %v78
  %v80 = vrot.slane %v79, 1
  %v81 = vmax.f32 %v79, %v80
  %v82 = vsub.f32 %v65, %v74
  %v83 = vsub.f32 %v66, %v81
  %v84 = vmul.f32 %v82, 1.442695
  %v85 = vpow.pop %v84
  %v86 = vmul.f32 %v83, 1.442695
  %v87 = vpow.pop %v86
  %v88 = vsel %vm67, %v85, 0.0
  %v89 = vrot.slane %v88, 4
  %v90 = vadd.f32 %v88, %v89
  %v91 = vrot.slane %v90, 2
  %v92 = vadd.f32 %v90, %v91
  %v93 = vrot.slane %v92, 1
  %v94 = vadd.f32 %v92, %v93
  %v95 = vsel %vm67, %v87, 0.0
  %v96 = vrot.slane %v95, 4
  %v97 = vadd.f32 %v95, %v96
  %v98 = vrot.slane %v97, 2
  %v99 = vadd.f32 %v97, %v98
  %v100 = vrot.slane %v99, 1
  %v101 = vadd.f32 %v99, %v100
  %v102 = vrcp.pop %v94
  %v103 = vrcp.pop %v101
  %v104 = vmul.f32 %v85, %v102
  %v105 = vmul.f32 %v87, %v103
  %v106 = vld [vmem:[%s2] sm:$0xf]
  %v107 = vld [vmem:[%s2 + $0x4] sm:$0xf]
  %v108 = vld [vmem:[%s2 + $0x8] sm:$0xf]
  %v109 = vld [vmem:[%s2 + $0xc] sm:$0xf]
  %v114 = vunpack.c.l.b16 %v106
  %v115 = vunpack.c.l.b16 %v107
  %v116 = vunpack.c.l.b16 %v108
  %v117 = vunpack.c.l.b16 %v109
  %v118 = vpack.c.b16 %v115, %v114
  %v119 = vpack.c.b16 %v117, %v116
  %122 = vmatpush.bf16.msra.mxu0 0
  %123 = vmatpush.bf16.msra.mxu0 0
  %124 = vmatpush.bf16.msra.mxu0 0
  %125 = vmatpush.bf16.msra.mxu0 0
  %126 = vmatpush.bf16.msra.mxu0 0
  %127 = vmatpush.bf16.msra.mxu0 0
  %128 = vmatpush.bf16.msra.mxu0 %v119
  %129 = vmatpush.bf16.msra.mxu0 %v118
  %130 = vmatmul.bf16.gmra.mxu0 %v49
  %v131 = vpop.f32.mrf.mxu0
  %v132 = vadd.f32 0.0, %v131
  %v133 = vpop.f32.mrf.mxu0
  %v134 = vadd.f32 0.0, %v133
  %135 = vdwg.mxu0
  %v136 = vpack.c.bf16 %v105, %v104
  %v137 = vld [vmem:[%s3] sm:$0x3]
  %v139 = vsel %vm67, %v136, 0
  %vm141 = vcmask 1041408
  %v143 = vsel %vm141, %v137, 0
  %145 = vmatpush.bf16.msra.mxu0 0
  %146 = vmatpush.bf16.msra.mxu0 0
  %147 = vmatpush.bf16.msra.mxu0 0
  %148 = vmatpush.bf16.msra.mxu0 0
  %149 = vmatpush.bf16.msra.mxu0 0
  %150 = vmatpush.bf16.msra.mxu0 0
  %151 = vmatpush.bf16.msra.mxu0 0
  %152 = vmatpush.bf16.msra.mxu0 %v143
  %153 = vmatmul.bf16.gmra.mxu0 %v139
  %v154 = vpop.f32.mrf.mxu0
  %v155 = vadd.f32 0.0, %v154
  %v156 = vpop.f32.mrf.mxu0
  %v157 = vadd.f32 0.0, %v156
  %158 = vdwg.mxu0
  %v159 = vmul.f32 %v155, %v132
  %v160 = vmul.f32 %v157, %v134
  %v161 = vsel %vm47, %v159, 0.0
  %v162 = vrot.slane %v161, 4
  %v163 = vadd.f32 %v161, %v162
  %v164 = vrot.slane %v163, 2
  %v165 = vadd.f32 %v163, %v164
  %v166 = vrot.slane %v165, 1
  %v167 = vadd.f32 %v165, %v166
  %v168 = vsel %vm47, %v160, 0.0
  %v169 = vrot.slane %v168, 4
  %v170 = vadd.f32 %v168, %v169
  %v171 = vrot.slane %v170, 2
  %v172 = vadd.f32 %v170, %v171
  %v173 = vrot.slane %v172, 1
  %v174 = vadd.f32 %v172, %v173
  %v175 = vpack.c.bf16 %v167, %v167
  %v176 = vpack.c.bf16 %v174, %v174
  %v177 = vld [vmem:[%s4] sm:$0xf]
  %v178 = vld [vmem:[%s4 + $0x4] sm:$0xf]
  %v179 = vld [vmem:[%s4 + $0x8] sm:$0xf]
  %v180 = vld [vmem:[%s4 + $0xc] sm:$0xf]
  %v181 = vld [vmem:[%s5] sm:$0x1]
  %v183 = vperm.slane %v181, 0
  %v187 = vunpack.c.l.b16 %v175
  %v188 = vunpack.c.l.b16 %v176
  %vm189 = vcmask 1041409
  %v190 = vsel %vm189, %v188, %v187
  %v191 = vpack.c.b16 %v190, %v190
  %v196 = vunpack.c.l.b16 %v177
  %v197 = vunpack.c.l.b16 %v178
  %v198 = vunpack.c.l.b16 %v179
  %v199 = vunpack.c.l.b16 %v180
  %v200 = vpack.c.b16 %v197, %v196
  %v201 = vpack.c.b16 %v199, %v198
  %v205 = vsel %vm47, %v191, 0
  %207 = vmatpush.bf16.msra.mxu0 0
  %208 = vmatpush.bf16.msra.mxu0 0
  %209 = vmatpush.bf16.msra.mxu0 0
  %210 = vmatpush.bf16.msra.mxu0 0
  %211 = vmatpush.bf16.msra.mxu0 0
  %212 = vmatpush.bf16.msra.mxu0 0
  %213 = vmatpush.bf16.msra.mxu0 %v201
  %214 = vmatpush.bf16.msra.mxu0 %v200
  %215 = vmatmul.bf16.gmra.mxu0 %v205
  %v216 = vpop.f32.mrf.mxu0
  %v217 = vadd.f32 %v183, %v216
  %v218 = vpop.f32.mrf.mxu0
  %219 = vdwg.mxu0
  %vm220 = vcmask 254976
  %221 = vst.msk [vmem:[%s6] sm:$0x3] %vm220, %v217
  // Predicated region
  $region26: #{perceiver_io_forward.2} parent=0 // pred_check
    _
  $region27: #{perceiver_io_forward.2} parent=0 // pred_check_branch
    %223 = sbr.rel (0) target = $region29
  $region28: #{perceiver_io_forward.2} parent=0 // pred_region
    _
  $region29: #{perceiver_io_forward.2} parent=0 // pred_fallthru
    _
  // Predicated region
  $region30: #{perceiver_io_forward.2} parent=0 // pred_check
    _
  $region31: #{perceiver_io_forward.2} parent=0 // pred_check_branch
    %225 = sbr.rel (0) target = $region33
  $region32: #{perceiver_io_forward.2} parent=0 // pred_region
    _
  $region33: #{perceiver_io_forward.2} parent=0 // pred_fallthru
    _

// kernel: perceiver_io_forward.3
$region0: #{perceiver_io_forward.3}
  #allocation0 [shape = 'u32[]', space=smem, size = 0x4, offset = 0x4, fixed_abs, tag = 'smem constant byte address 0x4 - core index']
  #allocation1 [shape = 'u32[72,128]{1,0:T(1,128)}', space=vmem, size = 0x9000, scoped, tag = 'internal scratch']
  #allocation2 [shape = 'f32[2,32]{1,0:T(2,128)}', space=vmem, size = 0x400, scoped, tag = 'scratch operand']
  #allocation3 [shape = 'bf16[2,32]{1,0:T(2,128)(2,1)}', space=vmem, size = 0x200, scoped, tag = 'scratch operand']
  #allocation4 [shape = 'f32[2,32]{1,0:T(2,128)}', space=vmem, size = 0x400, scoped, tag = 'scratch operand']
  %s0 = inlined_call_operand.vmem [shape: f32[2,32], index: 0, kind: input, shape index: {}]
  %s1 = inlined_call_operand.vmem [shape: f32[1,32], index: 1, kind: input, shape index: {}]
  %s2 = inlined_call_operand.vmem [shape: f32[1,32], index: 2, kind: input, shape index: {}]
  %s3 = inlined_call_operand.vmem [shape: f32[1,32], index: 3, kind: input, shape index: {}]
  %s4 = inlined_call_operand.vmem [shape: f32[1,32], index: 4, kind: input, shape index: {}]
  %s5 = inlined_call_operand.vmem [shape: bf16[32,1024], index: 5, kind: input, shape index: {}]
  %s6 = inlined_call_operand.vmem [shape: f32[1,1024], index: 6, kind: input, shape index: {}]
  %s7 = inlined_call_operand.vmem [shape: bf16[1024,32], index: 7, kind: input, shape index: {}]
  %s8 = inlined_call_operand.vmem [shape: f32[1,32], index: 8, kind: input, shape index: {}]
  %s9 = inlined_call_operand.vmem [shape: f32[1,32], index: 9, kind: input, shape index: {}]
  %s10 = inlined_call_operand.vmem [shape: f32[1,32], index: 10, kind: input, shape index: {}]
  %s11 = inlined_call_operand.vmem [shape: bf16[32,128], index: 11, kind: input, shape index: {}]
  %s12 = inlined_call_operand.vmem [shape: f32[1,128], index: 12, kind: input, shape index: {}]
  %s13 = inlined_call_operand.hbm [shape: f32[2,128], index: 13, kind: output, shape index: {}]
  %s14 = sld [smem:[#allocation0]]
  $region70: #{perceiver_io_forward.3} parent=0
    _
  %s16 = ssub.s32 1, %s14
  %s17 = scalar_select 0, %s16, %s14
  $region1: #{perceiver_io_forward.3} parent=0
    #allocation5 [shape = 'u8[1024]{0}', space=vmem, size = 0x400, scoped, tag = 'output window, operand 0, single buffered']
    #allocation6 [shape = 's32[1]{0}', space=sflag, size = 0x4, scoped, tag = 'scoped memory for perceiver_io_forward.3']
    %18 = vsyncpa [#allocation6], 0
    // Predicated region
    $region2: #{perceiver_io_forward.3} parent=1 // pred_check
      _
    $region3: #{perceiver_io_forward.3} parent=1 // pred_check_branch
      %20 = sbr.rel (0) target = $region5
    $region4: #{perceiver_io_forward.3} parent=1 // pred_region
      _
    $region5: #{perceiver_io_forward.3} parent=1 // pred_fallthru
      _
    // Predicated region
    $region6: #{perceiver_io_forward.3} parent=1 // pred_check
      _
    $region7: #{perceiver_io_forward.3} parent=1 // pred_check_branch
      %22 = sbr.rel (0) target = $region9
    $region8: #{perceiver_io_forward.3} parent=1 // pred_region
      _
    $region9: #{perceiver_io_forward.3} parent=1 // pred_fallthru
      _
    // Predicated region
    $region10: #{perceiver_io_forward.3} parent=1 // pred_check
      _
    $region11: #{perceiver_io_forward.3} parent=1 // pred_check_branch
      %24 = sbr.rel (0) target = $region13
    $region12: #{perceiver_io_forward.3} parent=1 // pred_region
      _
    $region13: #{perceiver_io_forward.3} parent=1 // pred_fallthru
      _
    // Predicated region
    $region14: #{perceiver_io_forward.3} parent=1 // pred_check
      _
    $region15: #{perceiver_io_forward.3} parent=1 // pred_check_branch
      %26 = sbr.rel (0) target = $region17
    $region16: #{perceiver_io_forward.3} parent=1 // pred_region
      _
    $region17: #{perceiver_io_forward.3} parent=1 // pred_fallthru
      _
    // Predicated region
    $region18: #{perceiver_io_forward.3} parent=1 // pred_check
      _
    $region19: #{perceiver_io_forward.3} parent=1 // pred_check_branch
      %28 = sbr.rel (0) target = $region21
    $region20: #{perceiver_io_forward.3} parent=1 // pred_region
      _
    $region21: #{perceiver_io_forward.3} parent=1 // pred_fallthru
      _
    // Predicated region
    $region22: #{perceiver_io_forward.3} parent=1 // pred_check
      _
    $region23: #{perceiver_io_forward.3} parent=1 // pred_check_branch
      %30 = sbr.rel (0) target = $region25
    $region24: #{perceiver_io_forward.3} parent=1 // pred_region
      _
    $region25: #{perceiver_io_forward.3} parent=1 // pred_fallthru
      _
    // Predicated region
    $region26: #{perceiver_io_forward.3} parent=1 // pred_check
      _
    $region27: #{perceiver_io_forward.3} parent=1 // pred_check_branch
      %32 = sbr.rel (0) target = $region29
    $region28: #{perceiver_io_forward.3} parent=1 // pred_region
      _
    $region29: #{perceiver_io_forward.3} parent=1 // pred_fallthru
      _
    // Predicated region
    $region30: #{perceiver_io_forward.3} parent=1 // pred_check
      _
    $region31: #{perceiver_io_forward.3} parent=1 // pred_check_branch
      %34 = sbr.rel (0) target = $region33
    $region32: #{perceiver_io_forward.3} parent=1 // pred_region
      _
    $region33: #{perceiver_io_forward.3} parent=1 // pred_fallthru
      _
    // Predicated region
    $region34: #{perceiver_io_forward.3} parent=1 // pred_check
      _
    $region35: #{perceiver_io_forward.3} parent=1 // pred_check_branch
      %36 = sbr.rel (0) target = $region37
    $region36: #{perceiver_io_forward.3} parent=1 // pred_region
      _
    $region37: #{perceiver_io_forward.3} parent=1 // pred_fallthru
      _
    // Predicated region
    $region38: #{perceiver_io_forward.3} parent=1 // pred_check
      _
    $region39: #{perceiver_io_forward.3} parent=1 // pred_check_branch
      %38 = sbr.rel (0) target = $region41
    $region40: #{perceiver_io_forward.3} parent=1 // pred_region
      _
    $region41: #{perceiver_io_forward.3} parent=1 // pred_fallthru
      _
    // Predicated region
    $region42: #{perceiver_io_forward.3} parent=1 // pred_check
      _
    $region43: #{perceiver_io_forward.3} parent=1 // pred_check_branch
      %40 = sbr.rel (0) target = $region45
    $region44: #{perceiver_io_forward.3} parent=1 // pred_region
      _
    $region45: #{perceiver_io_forward.3} parent=1 // pred_fallthru
      _
    // Predicated region
    $region46: #{perceiver_io_forward.3} parent=1 // pred_check
      _
    $region47: #{perceiver_io_forward.3} parent=1 // pred_check_branch
      %42 = sbr.rel (0) target = $region49
    $region48: #{perceiver_io_forward.3} parent=1 // pred_region
      _
    $region49: #{perceiver_io_forward.3} parent=1 // pred_fallthru
      _
    // Predicated region
    $region50: #{perceiver_io_forward.3} parent=1 // pred_check
      _
    $region51: #{perceiver_io_forward.3} parent=1 // pred_check_branch
      %44 = sbr.rel (0) target = $region53
    $region52: #{perceiver_io_forward.3} parent=1 // pred_region
      _
    $region53: #{perceiver_io_forward.3} parent=1 // pred_fallthru
      _
    %p46 = scmp.eq.s32.totalorder 0, 0
    // Predicated region
    $region54: #{perceiver_io_forward.3} parent=1 // pred_check
      %p47 = pneg %p46
    $region55: #{perceiver_io_forward.3} parent=1 // pred_check_branch
      %49 = sbr.rel (%p47) target = $region57
    $region56: #{perceiver_io_forward.3} parent=1 // pred_region
      %v50 = vld [vmem:[%s0] sm:$0x3]
      %v51 = vld [vmem:[%s1] sm:$0x1]
      %v52 = vld [vmem:[%s2] sm:$0x1]
      %vm53 = vcmask 254976
      %v54 = vsel %vm53, %v50, 0.0
      %55 = vadd.xlane.f32.xlu0 %v54
      %v56 = vpop.xlane.xlu0 %55
      %v57 = vrcp.pop 32.0
      %v58 = vmul.f32 32.0, %v57
      %v59 = vsub.f32 1.0, %v58
      %v60 = vmul.f32 %v57, %v59
      %v61 = vadd.f32 %v57, %v60
      %vm62 = vweird.f32 %v57
      %v63 = vsel %vm62, %v57, %v61
      %v64 = vmul.f32 %v56, %v63
      %v65 = vsub.f32 %v50, %v64
      %v66 = vmul.f32 %v65, %v65
      %v67 = vsel %vm53, %v66, 0.0
      %68 = vadd.xlane.f32.xlu0 %v67
      %v69 = vpop.xlane.xlu0 %68
      %v70 = vmul.f32 %v69, %v63
      %v71 = vadd.f32 %v70, 1e-05
      %v72 = vrsqrt.pop %v71
      %v73 = vmul.f32 %v72, %v71
      %v74 = vmul.f32 %v73, %v72
      %v75 = vmul.f32 0.5, %v74
      %v76 = vsub.f32 1.5, %v75
      %v77 = vmul.f32 %v72, %v76
      %vm78 = vweird.f32 %v71
      %vm79 = vweird.f32 %v72
      %vm80 = vmor %vm78, %vm79
      %v81 = vsel %vm80, %v72, %v77
      %v82 = vmul.f32 %v65, %v81
      %v84 = vperm.slane %v51, 0
      %v86 = vmul.f32 %v82, %v84
      %v88 = vperm.slane %v52, 0
      %v90 = vadd.f32 %v86, %v88
      %91 = vst.msk [vmem:[#allocation2] sm:$0x3] %vm53, %v90
      %v92 = vld [vmem:[%s3] sm:$0x1]
      %v93 = vld [vmem:[%s4] sm:$0x1]
      %v94 = vsel %vm53, %v90, 0.0
      %95 = vadd.xlane.f32.xlu0 %v94
      %v96 = vpop.xlane.xlu0 %95
      %v97 = vmul.f32 %v96, %v63
      %v98 = vsub.f32 %v90, %v97
      %v99 = vmul.f32 %v98, %v98
      %v100 = vsel %vm53, %v99, 0.0
      %101 = vadd.xlane.f32.xlu0 %v100
      %v102 = vpop.xlane.xlu0 %101
      %v103 = vmul.f32 %v102, %v63
      %v104 = vadd.f32 %v103, 1e-05
      %v105 = vrsqrt.pop %v104
      %v106 = vmul.f32 %v105, %v104
      %v107 = vmul.f32 %v106, %v105
      %v108 = vmul.f32 0.5, %v107
      %v109 = vsub.f32 1.5, %v108
      %v110 = vmul.f32 %v105, %v109
      %vm111 = vweird.f32 %v104
      %vm112 = vweird.f32 %v105
      %vm113 = vmor %vm111, %vm112
      %v114 = vsel %vm113, %v105, %v110
      %v115 = vmul.f32 %v98, %v114
      %v117 = vperm.slane %v92, 0
      %v119 = vmul.f32 %v115, %v117
      %v121 = vperm.slane %v93, 0
      %v123 = vadd.f32 %v119, %v121
      %v124 = vpack.c.bf16 %v123, %v123
      %vm125 = vcmask 253952
      %126 = vst.msk [vmem:[#allocation3] sm:$0x1] %vm125, %v124
      %127 = vst.msk [vmem:[#allocation4] sm:$0x3] %vm53, 0.0
    $region57: #{perceiver_io_forward.3} parent=1 // pred_fallthru
      _
    %v128 = vld [vmem:[#allocation3] sm:$0x1]
    %v129 = vld [vmem:[%s5] sm:$0xff]
    %v130 = vld [vmem:[%s5 + $0x8] sm:$0xff]
    %v131 = vld [vmem:[%s5 + $0x10] sm:$0xff]
    %v132 = vld [vmem:[%s5 + $0x18] sm:$0xff]
    %v133 = vld [vmem:[%s5 + $0x20] sm:$0xff]
    %v134 = vld [vmem:[%s5 + $0x28] sm:$0xff]
    %v135 = vld [vmem:[%s5 + $0x30] sm:$0xff]
    %v136 = vld [vmem:[%s5 + $0x38] sm:$0xff]
    %v137 = vld [vmem:[%s5 + $0x40] sm:$0xff]
    %v138 = vld [vmem:[%s5 + $0x48] sm:$0xff]
    %v139 = vld [vmem:[%s5 + $0x50] sm:$0xff]
    %v140 = vld [vmem:[%s5 + $0x58] sm:$0xff]
    %v141 = vld [vmem:[%s5 + $0x60] sm:$0xff]
    %v142 = vld [vmem:[%s5 + $0x68] sm:$0xff]
    %v143 = vld [vmem:[%s5 + $0x70] sm:$0xff]
    %v144 = vld [vmem:[%s5 + $0x78] sm:$0xff]
    %v145 = vld [vmem:[%s6] sm:$0xff]
    %v147 = vperm.slane %v145, 0
    %v148 = vperm.slane %v145, 1
    %v149 = vperm.slane %v145, 2
    %v150 = vperm.slane %v145, 3
    %v151 = vperm.slane %v145, 4
    %v152 = vperm.slane %v145, 5
    %v153 = vperm.slane %v145, 6
    %v154 = vperm.slane %v145, 7
    %v179 = vunpack.c.l.b16 %v129
    %v180 = vunpack.c.h.b16 %v129
    %v181 = vunpack.c.l.b16 %v130
    %v182 = vunpack.c.h.b16 %v130
    %v183 = vunpack.c.l.b16 %v131
    %v184 = vunpack.c.h.b16 %v131
    %v185 = vunpack.c.l.b16 %v132
    %v186 = vunpack.c.h.b16 %v132
    %v187 = vunpack.c.l.b16 %v133
    %v188 = vunpack.c.h.b16 %v133
    %v189 = vunpack.c.l.b16 %v134
    %v190 = vunpack.c.h.b16 %v134
    %v191 = vunpack.c.l.b16 %v135
    %v192 = vunpack.c.h.b16 %v135
    %v193 = vunpack.c.l.b16 %v136
    %v194 = vunpack.c.h.b16 %v136
    %v195 = vunpack.c.l.b16 %v137
    %v196 = vunpack.c.h.b16 %v137
    %v197 = vunpack.c.l.b16 %v138
    %v198 = vunpack.c.h.b16 %v138
    %v199 = vunpack.c.l.b16 %v139
    %v200 = vunpack.c.h.b16 %v139
    %v201 = vunpack.c.l.b16 %v140
    %v202 = vunpack.c.h.b16 %v140
    %v203 = vunpack.c.l.b16 %v141
    %v204 = vunpack.c.h.b16 %v141
    %v205 = vunpack.c.l.b16 %v142
    %v206 = vunpack.c.h.b16 %v142
    %v207 = vunpack.c.l.b16 %v143
    %v208 = vunpack.c.h.b16 %v143
    %v209 = vunpack.c.l.b16 %v144
    %v210 = vunpack.c.h.b16 %v144
    %v211 = vpack.c.b16 %v187, %v179
    %v212 = vpack.c.b16 %v188, %v180
    %v213 = vpack.c.b16 %v189, %v181
    %v214 = vpack.c.b16 %v190, %v182
    %v215 = vpack.c.b16 %v191, %v183
    %v216 = vpack.c.b16 %v192, %v184
    %v217 = vpack.c.b16 %v193, %v185
    %v218 = vpack.c.b16 %v194, %v186
    %v219 = vpack.c.b16 %v203, %v195
    %v220 = vpack.c.b16 %v204, %v196
    %v221 = vpack.c.b16 %v205, %v197
    %v222 = vpack.c.b16 %v206, %v198
    %v223 = vpack.c.b16 %v207, %v199
    %v224 = vpack.c.b16 %v208, %v200
    %v225 = vpack.c.b16 %v209, %v201
    %v226 = vpack.c.b16 %v210, %v202
    %vm243 = vcmask 261120
    %v245 = vsel %vm243, %v128, 0
    %247 = vmatpush.bf16.msra.mxu0 0
    %248 = vmatpush.bf16.msra.mxu0 0
    %249 = vmatpush.bf16.msra.mxu0 0
    %250 = vmatpush.bf16.msra.mxu0 0
    %251 = vmatpush.bf16.msra.mxu0 0
    %252 = vmatpush.bf16.msra.mxu0 0
    %253 = vmatpush.bf16.msra.mxu0 %v219
    %254 = vmatpush.bf16.msra.mxu0 %v211
    %255 = vmatmul.bf16.gmra.mxu0 %v245
    %v256 = vpop.f32.mrf.mxu0
    %v257 = vadd.f32 %v147, %v256
    %v258 = vpop.f32.mrf.mxu0
    %259 = vdwg.mxu0
    %260 = vmatpush.bf16.msra.mxu0 0
    %261 = vmatpush.bf16.msra.mxu0 0
    %262 = vmatpush.bf16.msra.mxu0 0
    %263 = vmatpush.bf16.msra.mxu0 0
    %264 = vmatpush.bf16.msra.mxu0 0
    %265 = vmatpush.bf16.msra.mxu0 0
    %266 = vmatpush.bf16.msra.mxu0 %v220
    %267 = vmatpush.bf16.msra.mxu0 %v212
    %268 = vmatmul.bf16.gmra.mxu0 %v245
    %v269 = vpop.f32.mrf.mxu0
    %v270 = vadd.f32 %v148, %v269
    %v271 = vpop.f32.mrf.mxu0
    %272 = vdwg.mxu0
    %273 = vmatpush.bf16.msra.mxu0 0
    %274 = vmatpush.bf16.msra.mxu0 0
    %275 = vmatpush.bf16.msra.mxu0 0
    %276 = vmatpush.bf16.msra.mxu0 0
    %277 = vmatpush.bf16.msra.mxu0 0
    %278 = vmatpush.bf16.msra.mxu0 0
    %279 = vmatpush.bf16.msra.mxu0 %v221
    %280 = vmatpush.bf16.msra.mxu0 %v213
    %281 = vmatmul.bf16.gmra.mxu0 %v245
    %v282 = vpop.f32.mrf.mxu0
    %v283 = vadd.f32 %v149, %v282
    %v284 = vpop.f32.mrf.mxu0
    %285 = vdwg.mxu0
    %286 = vmatpush.bf16.msra.mxu0 0
    %287 = vmatpush.bf16.msra.mxu0 0
    %288 = vmatpush.bf16.msra.mxu0 0
    %289 = vmatpush.bf16.msra.mxu0 0
    %290 = vmatpush.bf16.msra.mxu0 0
    %291 = vmatpush.bf16.msra.mxu0 0
    %292 = vmatpush.bf16.msra.mxu0 %v222
    %293 = vmatpush.bf16.msra.mxu0 %v214
    %294 = vmatmul.bf16.gmra.mxu0 %v245
    %v295 = vpop.f32.mrf.mxu0
    %v296 = vadd.f32 %v150, %v295
    %v297 = vpop.f32.mrf.mxu0
    %298 = vdwg.mxu0
    %299 = vmatpush.bf16.msra.mxu0 0
    %300 = vmatpush.bf16.msra.mxu0 0
    %301 = vmatpush.bf16.msra.mxu0 0
    %302 = vmatpush.bf16.msra.mxu0 0
    %303 = vmatpush.bf16.msra.mxu0 0
    %304 = vmatpush.bf16.msra.mxu0 0
    %305 = vmatpush.bf16.msra.mxu0 %v223
    %306 = vmatpush.bf16.msra.mxu0 %v215
    %307 = vmatmul.bf16.gmra.mxu0 %v245
    %v308 = vpop.f32.mrf.mxu0
    %v309 = vadd.f32 %v151, %v308
    %v310 = vpop.f32.mrf.mxu0
    %311 = vdwg.mxu0
    %312 = vmatpush.bf16.msra.mxu0 0
    %313 = vmatpush.bf16.msra.mxu0 0
    %314 = vmatpush.bf16.msra.mxu0 0
    %315 = vmatpush.bf16.msra.mxu0 0
    %316 = vmatpush.bf16.msra.mxu0 0
    %317 = vmatpush.bf16.msra.mxu0 0
    %318 = vmatpush.bf16.msra.mxu0 %v224
    %319 = vmatpush.bf16.msra.mxu0 %v216
    %320 = vmatmul.bf16.gmra.mxu0 %v245
    %v321 = vpop.f32.mrf.mxu0
    %v322 = vadd.f32 %v152, %v321
    %v323 = vpop.f32.mrf.mxu0
    %324 = vdwg.mxu0
    %325 = vmatpush.bf16.msra.mxu0 0
    %326 = vmatpush.bf16.msra.mxu0 0
    %327 = vmatpush.bf16.msra.mxu0 0
    %328 = vmatpush.bf16.msra.mxu0 0
    %329 = vmatpush.bf16.msra.mxu0 0
    %330 = vmatpush.bf16.msra.mxu0 0
    %331 = vmatpush.bf16.msra.mxu0 %v225
    %332 = vmatpush.bf16.msra.mxu0 %v217
    %333 = vmatmul.bf16.gmra.mxu0 %v245
    %v334 = vpop.f32.mrf.mxu0
    %v335 = vadd.f32 %v153, %v334
    %v336 = vpop.f32.mrf.mxu0
    %337 = vdwg.mxu0
    %338 = vmatpush.bf16.msra.mxu0 0
    %339 = vmatpush.bf16.msra.mxu0 0
    %340 = vmatpush.bf16.msra.mxu0 0
    %341 = vmatpush.bf16.msra.mxu0 0
    %342 = vmatpush.bf16.msra.mxu0 0
    %343 = vmatpush.bf16.msra.mxu0 0
    %344 = vmatpush.bf16.msra.mxu0 %v226
    %345 = vmatpush.bf16.msra.mxu0 %v218
    %346 = vmatmul.bf16.gmra.mxu0 %v245
    %v347 = vpop.f32.mrf.mxu0
    %v348 = vadd.f32 %v154, %v347
    %v349 = vpop.f32.mrf.mxu0
    %350 = vdwg.mxu0
    %v351 = vmul.f32 %v257, 0.5
    %v352 = vmul.f32 %v270, 0.5
    %v353 = vmul.f32 %v283, 0.5
    %v354 = vmul.f32 %v296, 0.5
    %v355 = vmul.f32 %v309, 0.5
    %v356 = vmul.f32 %v322, 0.5
    %v357 = vmul.f32 %v335, 0.5
    %v358 = vmul.f32 %v348, 0.5
    %v359 = vmul.f32 %v257, 0.70710677
    %v360 = vmul.f32 %v270, 0.70710677
    %v361 = vmul.f32 %v283, 0.70710677
    %v362 = vmul.f32 %v296, 0.70710677
    %v363 = vmul.f32 %v309, 0.70710677
    %v364 = vmul.f32 %v322, 0.70710677
    %v365 = vmul.f32 %v335, 0.70710677
    %v366 = vmul.f32 %v348, 0.70710677
    %v367 = vmul.f32 %v359, %v359
    %v368 = vmin.f32 16.0, %v367
    %v369 = vmul.f32 %v368, 2.1237322e-06
    %v370 = vadd.f32 %v369, 0.00028619796
    %v371 = vmul.f32 %v368, %v370
    %v372 = vadd.f32 %v371, 0.0036580483
    %v373 = vmul.f32 %v368, %v372
    %v374 = vadd.f32 %v373, 0.05243302
    %v375 = vmul.f32 %v368, %v374
    %v376 = vadd.f32 %v375, 0.18741608
    %v377 = vmul.f32 %v368, %v376
    %v378 = vadd.f32 %v377, 1.1283791
    %v379 = vmul.f32 %v359, %v378
    %v380 = vmul.f32 %v368, 3.8918573e-05
    %v381 = vadd.f32 %v380, 0.001143296
    %v382 = vmul.f32 %v368, %v381
    %v383 = vadd.f32 %v382, 0.014752088
    %v384 = vmul.f32 %v368, %v383
    %v385 = vadd.f32 %v384, 0.112945676
    %v386 = vmul.f32 %v368, %v385
    %v387 = vadd.f32 %v386, 0.4994258
    %v388 = vmul.f32 %v368, %v387
    %v389 = vadd.f32 %v388, 1.0
    %v390 = vrcp.pop %v389
    %v391 = vmul.f32 %v389, %v390
    %v392 = vsub.f32 1.0, %v391
    %v393 = vmul.f32 %v390, %v392
    %v394 = vadd.f32 %v390, %v393
    %vm395 = vweird.f32 %v389
    %vm396 = vweird.f32 %v390
    %vm397 = vmor %vm395, %vm396
    %v398 = vsel %vm397, %v390, %v394
    %v399 = vand.u32 2147483647, %v389
    %vm400 = vcmp.eq.f32.partialorder %v399, 8.507059e+37
    %v401 = vand.u32 %v389, 2147483648
    %v402 = vor.u32 1.1754944e-38, %v401
    %v403 = vsel %vm400, %v402, %v398
    %v404 = vmul.f32 %v379, %v403
    %v405 = vmin.f32 %v404, 1.0
    %v406 = vmax.f32 %v405, -1.0
    %v407 = vmul.f32 %v360, %v360
    %v408 = vmin.f32 16.0, %v407
    %v409 = vmul.f32 %v408, 2.1237322e-06
    %v410 = vadd.f32 %v409, 0.00028619796
    %v411 = vmul.f32 %v408, %v410
    %v412 = vadd.f32 %v411, 0.0036580483
    %v413 = vmul.f32 %v408, %v412
    %v414 = vadd.f32 %v413, 0.05243302
    %v415 = vmul.f32 %v408, %v414
    %v416 = vadd.f32 %v415, 0.18741608
    %v417 = vmul.f32 %v408, %v416
    %v418 = vadd.f32 %v417, 1.1283791
    %v419 = vmul.f32 %v360, %v418
    %v420 = vmul.f32 %v408, 3.8918573e-05
    %v421 = vadd.f32 %v420, 0.001143296
    %v422 = vmul.f32 %v408, %v421
    %v423 = vadd.f32 %v422, 0.014752088
    %v424 = vmul.f32 %v408, %v423
    %v425 = vadd.f32 %v424, 0.112945676
    %v426 = vmul.f32 %v408, %v425
    %v427 = vadd.f32 %v426, 0.4994258
    %v428 = vmul.f32 %v408, %v427
    %v429 = vadd.f32 %v428, 1.0
    %v430 = vrcp.pop %v429
    %v431 = vmul.f32 %v429, %v430
    %v432 = vsub.f32 1.0, %v431
    %v433 = vmul.f32 %v430, %v432
    %v434 = vadd.f32 %v430, %v433
    %vm435 = vweird.f32 %v429
    %vm436 = vweird.f32 %v430
    %vm437 = vmor %vm435, %vm436
    %v438 = vsel %vm437, %v430, %v434
    %v439 = vand.u32 2147483647, %v429
    %vm440 = vcmp.eq.f32.partialorder %v439, 8.507059e+37
    %v441 = vand.u32 %v429, 2147483648
    %v442 = vor.u32 1.1754944e-38, %v441
    %v443 = vsel %vm440, %v442, %v438
    %v444 = vmul.f32 %v419, %v443
    %v445 = vmin.f32 %v444, 1.0
    %v446 = vmax.f32 %v445, -1.0
    %v447 = vmul.f32 %v361, %v361
    %v448 = vmin.f32 16.0, %v447
    %v449 = vmul.f32 %v448, 2.1237322e-06
    %v450 = vadd.f32 %v449, 0.00028619796
    %v451 = vmul.f32 %v448, %v450
    %v452 = vadd.f32 %v451, 0.0036580483
    %v453 = vmul.f32 %v448, %v452
    %v454 = vadd.f32 %v453, 0.05243302
    %v455 = vmul.f32 %v448, %v454
    %v456 = vadd.f32 %v455, 0.18741608
    %v457 = vmul.f32 %v448, %v456
    %v458 = vadd.f32 %v457, 1.1283791
    %v459 = vmul.f32 %v361, %v458
    %v460 = vmul.f32 %v448, 3.8918573e-05
    %v461 = vadd.f32 %v460, 0.001143296
    %v462 = vmul.f32 %v448, %v461
    %v463 = vadd.f32 %v462, 0.014752088
    %v464 = vmul.f32 %v448, %v463
    %v465 = vadd.f32 %v464, 0.112945676
    %v466 = vmul.f32 %v448, %v465
    %v467 = vadd.f32 %v466, 0.4994258
    %v468 = vmul.f32 %v448, %v467
    %v469 = vadd.f32 %v468, 1.0
    %v470 = vrcp.pop %v469
    %v471 = vmul.f32 %v469, %v470
    %v472 = vsub.f32 1.0, %v471
    %v473 = vmul.f32 %v470, %v472
    %v474 = vadd.f32 %v470, %v473
    %vm475 = vweird.f32 %v469
    %vm476 = vweird.f32 %v470
    %vm477 = vmor %vm475, %vm476
    %v478 = vsel %vm477, %v470, %v474
    %v479 = vand.u32 2147483647, %v469
    %vm480 = vcmp.eq.f32.partialorder %v479, 8.507059e+37
    %v481 = vand.u32 %v469, 2147483648
    %v482 = vor.u32 1.1754944e-38, %v481
    %v483 = vsel %vm480, %v482, %v478
    %v484 = vmul.f32 %v459, %v483
    %v485 = vmin.f32 %v484, 1.0
    %v486 = vmax.f32 %v485, -1.0
    %v487 = vmul.f32 %v362, %v362
    %v488 = vmin.f32 16.0, %v487
    %v489 = vmul.f32 %v488, 2.1237322e-06
    %v490 = vadd.f32 %v489, 0.00028619796
    %v491 = vmul.f32 %v488, %v490
    %v492 = vadd.f32 %v491, 0.0036580483
    %v493 = vmul.f32 %v488, %v492
    %v494 = vadd.f32 %v493, 0.05243302
    %v495 = vmul.f32 %v488, %v494
    %v496 = vadd.f32 %v495, 0.18741608
    %v497 = vmul.f32 %v488, %v496
    %v498 = vadd.f32 %v497, 1.1283791
    %v499 = vmul.f32 %v362, %v498
    %v500 = vmul.f32 %v488, 3.8918573e-05
    %v501 = vadd.f32 %v500, 0.001143296
    %v502 = vmul.f32 %v488, %v501
    %v503 = vadd.f32 %v502, 0.014752088
    %v504 = vmul.f32 %v488, %v503
    %v505 = vadd.f32 %v504, 0.112945676
    %v506 = vmul.f32 %v488, %v505
    %v507 = vadd.f32 %v506, 0.4994258
    %v508 = vmul.f32 %v488, %v507
    %v509 = vadd.f32 %v508, 1.0
    %v510 = vrcp.pop %v509
    %v511 = vmul.f32 %v509, %v510
    %v512 = vsub.f32 1.0, %v511
    %v513 = vmul.f32 %v510, %v512
    %v514 = vadd.f32 %v510, %v513
    %vm515 = vweird.f32 %v509
    %vm516 = vweird.f32 %v510
    %vm517 = vmor %vm515, %vm516
    %v518 = vsel %vm517, %v510, %v514
    %v519 = vand.u32 2147483647, %v509
    %vm520 = vcmp.eq.f32.partialorder %v519, 8.507059e+37
    %v521 = vand.u32 %v509, 2147483648
    %v522 = vor.u32 1.1754944e-38, %v521
    %v523 = vsel %vm520, %v522, %v518
    %v524 = vmul.f32 %v499, %v523
    %v525 = vmin.f32 %v524, 1.0
    %v526 = vmax.f32 %v525, -1.0
    %v527 = vmul.f32 %v363, %v363
    %v528 = vmin.f32 16.0, %v527
    %v529 = vmul.f32 %v528, 2.1237322e-06
    %v530 = vadd.f32 %v529, 0.00028619796
    %v531 = vmul.f32 %v528, %v530
    %v532 = vadd.f32 %v531, 0.0036580483
    %v533 = vmul.f32 %v528, %v532
    %v534 = vadd.f32 %v533, 0.05243302
    %v535 = vmul.f32 %v528, %v534
    %v536 = vadd.f32 %v535, 0.18741608
    %v537 = vmul.f32 %v528, %v536
    %v538 = vadd.f32 %v537, 1.1283791
    %v539 = vmul.f32 %v363, %v538
    %v540 = vmul.f32 %v528, 3.8918573e-05
    %v541 = vadd.f32 %v540, 0.001143296
    %v542 = vmul.f32 %v528, %v541
    %v543 = vadd.f32 %v542, 0.014752088
    %v544 = vmul.f32 %v528, %v543
    %v545 = vadd.f32 %v544, 0.112945676
    %v546 = vmul.f32 %v528, %v545
    %v547 = vadd.f32 %v546, 0.4994258
    %v548 = vmul.f32 %v528, %v547
    %v549 = vadd.f32 %v548, 1.0
    %v550 = vrcp.pop %v549
    %v551 = vmul.f32 %v549, %v550
    %v552 = vsub.f32 1.0, %v551
    %v553 = vmul.f32 %v550, %v552
    %v554 = vadd.f32 %v550, %v553
    %vm555 = vweird.f32 %v549
    %vm556 = vweird.f32 %v550
    %vm557 = vmor %vm555, %vm556
    %v558 = vsel %vm557, %v550, %v554
    %v559 = vand.u32 2147483647, %v549
    %vm560 = vcmp.eq.f32.partialorder %v559, 8.507059e+37
    %v561 = vand.u32 %v549, 2147483648
    %v562 = vor.u32 1.1754944e-38, %v561
    %v563 = vsel %vm560, %v562, %v558
    %v564 = vmul.f32 %v539, %v563
    %v565 = vmin.f32 %v564, 1.0
    %v566 = vmax.f32 %v565, -1.0
    %v567 = vmul.f32 %v364, %v364
    %v568 = vmin.f32 16.0, %v567
    %v569 = vmul.f32 %v568, 2.1237322e-06
    %v570 = vadd.f32 %v569, 0.00028619796
    %v571 = vmul.f32 %v568, %v570
    %v572 = vadd.f32 %v571, 0.0036580483
    %v573 = vmul.f32 %v568, %v572
    %v574 = vadd.f32 %v573, 0.05243302
    %v575 = vmul.f32 %v568, %v574
    %v576 = vadd.f32 %v575, 0.18741608
    %v577 = vmul.f32 %v568, %v576
    %v578 = vadd.f32 %v577, 1.1283791
    %v579 = vmul.f32 %v364, %v578
    %v580 = vmul.f32 %v568, 3.8918573e-05
    %v581 = vadd.f32 %v580, 0.001143296
    %v582 = vmul.f32 %v568, %v581
    %v583 = vadd.f32 %v582, 0.014752088
    %v584 = vmul.f32 %v568, %v583
    %v585 = vadd.f32 %v584, 0.112945676
    %v586 = vmul.f32 %v568, %v585
    %v587 = vadd.f32 %v586, 0.4994258
    %v588 = vmul.f32 %v568, %v587
    %v589 = vadd.f32 %v588, 1.0
    %v590 = vrcp.pop %v589
    %v591 = vmul.f32 %v589, %v590
    %v592 = vsub.f32 1.0, %v591
    %v593 = vmul.f32 %v590, %v592
    %v594 = vadd.f32 %v590, %v593
    %vm595 = vweird.f32 %v589
    %vm596 = vweird.f32 %v590
    %vm597 = vmor %vm595, %vm596
    %v598 = vsel %vm597, %v590, %v594
    %v599 = vand.u32 2147483647, %v589
    %vm600 = vcmp.eq.f32.partialorder %v599, 8.507059e+37
    %v601 = vand.u32 %v589, 2147483648
    %v602 = vor.u32 1.1754944e-38, %v601
    %v603 = vsel %vm600, %v602, %v598
    %v604 = vmul.f32 %v579, %v603
    %v605 = vmin.f32 %v604, 1.0
    %v606 = vmax.f32 %v605, -1.0
    %v607 = vmul.f32 %v365, %v365
    %v608 = vmin.f32 16.0, %v607
    %v609 = vmul.f32 %v608, 2.1237322e-06
    %v610 = vadd.f32 %v609, 0.00028619796
    %v611 = vmul.f32 %v608, %v610
    %v612 = vadd.f32 %v611, 0.0036580483
    %v613 = vmul.f32 %v608, %v612
    %v614 = vadd.f32 %v613, 0.05243302
    %v615 = vmul.f32 %v608, %v614
    %v616 = vadd.f32 %v615, 0.18741608
    %v617 = vmul.f32 %v608, %v616
    %v618 = vadd.f32 %v617, 1.1283791
    %v619 = vmul.f32 %v365, %v618
    %v620 = vmul.f32 %v608, 3.8918573e-05
    %v621 = vadd.f32 %v620, 0.001143296
    %v622 = vmul.f32 %v608, %v621
    %v623 = vadd.f32 %v622, 0.014752088
    %v624 = vmul.f32 %v608, %v623
    %v625 = vadd.f32 %v624, 0.112945676
    %v626 = vmul.f32 %v608, %v625
    %v627 = vadd.f32 %v626, 0.4994258
    %v628 = vmul.f32 %v608, %v627
    %v629 = vadd.f32 %v628, 1.0
    %v630 = vrcp.pop %v629
    %v631 = vmul.f32 %v629, %v630
    %v632 = vsub.f32 1.0, %v631
    %v633 = vmul.f32 %v630, %v632
    %v634 = vadd.f32 %v630, %v633
    %vm635 = vweird.f32 %v629
    %vm636 = vweird.f32 %v630
    %vm637 = vmor %vm635, %vm636
    %v638 = vsel %vm637, %v630, %v634
    %v639 = vand.u32 2147483647, %v629
    %vm640 = vcmp.eq.f32.partialorder %v639, 8.507059e+37
    %v641 = vand.u32 %v629, 2147483648
    %v642 = vor.u32 1.1754944e-38, %v641
    %v643 = vsel %vm640, %v642, %v638
    %v644 = vmul.f32 %v619, %v643
    %v645 = vmin.f32 %v644, 1.0
    %v646 = vmax.f32 %v645, -1.0
    %v647 = vmul.f32 %v366, %v366
    %v648 = vmin.f32 16.0, %v647
    %v649 = vmul.f32 %v648, 2.1237322e-06
    %v650 = vadd.f32 %v649, 0.00028619796
    %v651 = vmul.f32 %v648, %v650
    %v652 = vadd.f32 %v651, 0.0036580483
    %v653 = vmul.f32 %v648, %v652
    %v654 = vadd.f32 %v653, 0.05243302
    %v655 = vmul.f32 %v648, %v654
    %v656 = vadd.f32 %v655, 0.18741608
    %v657 = vmul.f32 %v648, %v656
    %v658 = vadd.f32 %v657, 1.1283791
    %v659 = vmul.f32 %v366, %v658
    %v660 = vmul.f32 %v648, 3.8918573e-05
    %v661 = vadd.f32 %v660, 0.001143296
    %v662 = vmul.f32 %v648, %v661
    %v663 = vadd.f32 %v662, 0.014752088
    %v664 = vmul.f32 %v648, %v663
    %v665 = vadd.f32 %v664, 0.112945676
    %v666 = vmul.f32 %v648, %v665
    %v667 = vadd.f32 %v666, 0.4994258
    %v668 = vmul.f32 %v648, %v667
    %v669 = vadd.f32 %v668, 1.0
    %v670 = vrcp.pop %v669
    %v671 = vmul.f32 %v669, %v670
    %v672 = vsub.f32 1.0, %v671
    %v673 = vmul.f32 %v670, %v672
    %v674 = vadd.f32 %v670, %v673
    %vm675 = vweird.f32 %v669
    %vm676 = vweird.f32 %v670
    %vm677 = vmor %vm675, %vm676
    %v678 = vsel %vm677, %v670, %v674
    %v679 = vand.u32 2147483647, %v669
    %vm680 = vcmp.eq.f32.partialorder %v679, 8.507059e+37
    %v681 = vand.u32 %v669, 2147483648
    %v682 = vor.u32 1.1754944e-38, %v681
    %v683 = vsel %vm680, %v682, %v678
    %v684 = vmul.f32 %v659, %v683
    %v685 = vmin.f32 %v684, 1.0
    %v686 = vmax.f32 %v685, -1.0
    %v687 = vadd.f32 %v406, 1.0
    %v688 = vadd.f32 %v446, 1.0
    %v689 = vadd.f32 %v486, 1.0
    %v690 = vadd.f32 %v526, 1.0
    %v691 = vadd.f32 %v566, 1.0
    %v692 = vadd.f32 %v606, 1.0
    %v693 = vadd.f32 %v646, 1.0
    %v694 = vadd.f32 %v686, 1.0
    %v695 = vmul.f32 %v351, %v687
    %v696 = vmul.f32 %v352, %v688
    %v697 = vmul.f32 %v353, %v689
    %v698 = vmul.f32 %v354, %v690
    %v699 = vmul.f32 %v355, %v691
    %v700 = vmul.f32 %v356, %v692
    %v701 = vmul.f32 %v357, %v693
    %v702 = vmul.f32 %v358, %v694
    %v703 = vld [vmem:[#allocation4] sm:$0x3]
    %v704 = vpack.c.bf16 %v695, %v695
    %v705 = vpack.c.bf16 %v696, %v696
    %v706 = vpack.c.bf16 %v697, %v697
    %v707 = vpack.c.bf16 %v698, %v698
    %v708 = vpack.c.bf16 %v699, %v699
    %v709 = vpack.c.bf16 %v700, %v700
    %v710 = vpack.c.bf16 %v701, %v701
    %v711 = vpack.c.bf16 %v702, %v702
    %v712 = vld [vmem:[%s7] sm:$0xf]
    %v713 = vld [vmem:[%s7 + $0x4] sm:$0xf]
    %v714 = vld [vmem:[%s7 + $0x8] sm:$0xf]
    %v715 = vld [vmem:[%s7 + $0xc] sm:$0xf]
    %v716 = vld [vmem:[%s7 + $0x10] sm:$0xf]
    %v717 = vld [vmem:[%s7 + $0x14] sm:$0xf]
    %v718 = vld [vmem:[%s7 + $0x18] sm:$0xf]
    %v719 = vld [vmem:[%s7 + $0x1c] sm:$0xf]
    %v720 = vld [vmem:[%s7 + $0x20] sm:$0xf]
    %v721 = vld [vmem:[%s7 + $0x24] sm:$0xf]
    %v722 = vld [vmem:[%s7 + $0x28] sm:$0xf]
    %v723 = vld [vmem:[%s7 + $0x2c] sm:$0xf]
    %v724 = vld [vmem:[%s7 + $0x30] sm:$0xf]
    %v725 = vld [vmem:[%s7 + $0x34] sm:$0xf]
    %v726 = vld [vmem:[%s7 + $0x38] sm:$0xf]
    %v727 = vld [vmem:[%s7 + $0x3c] sm:$0xf]
    %v728 = vld [vmem:[%s7 + $0x40] sm:$0xf]
    %v729 = vld [vmem:[%s7 + $0x44] sm:$0xf]
    %v730 = vld [vmem:[%s7 + $0x48] sm:$0xf]
    %v731 = vld [vmem:[%s7 + $0x4c] sm:$0xf]
    %v732 = vld [vmem:[%s7 + $0x50] sm:$0xf]
    %v733 = vld [vmem:[%s7 + $0x54] sm:$0xf]
    %v734 = vld [vmem:[%s7 + $0x58] sm:$0xf]
    %v735 = vld [vmem:[%s7 + $0x5c] sm:$0xf]
    %v736 = vld [vmem:[%s7 + $0x60] sm:$0xf]
    %v737 = vld [vmem:[%s7 + $0x64] sm:$0xf]
    %v738 = vld [vmem:[%s7 + $0x68] sm:$0xf]
    %v739 = vld [vmem:[%s7 + $0x6c] sm:$0xf]
    %v740 = vld [vmem:[%s7 + $0x70] sm:$0xf]
    %v741 = vld [vmem:[%s7 + $0x74] sm:$0xf]
    %v742 = vld [vmem:[%s7 + $0x78] sm:$0xf]
    %v743 = vld [vmem:[%s7 + $0x7c] sm:$0xf]
    %v744 = vld [vmem:[%s7 + $0x80] sm:$0xf]
    %v745 = vld [vmem:[%s7 + $0x84] sm:$0xf]
    %v746 = vld [vmem:[%s7 + $0x88] sm:$0xf]
    %v747 = vld [vmem:[%s7 + $0x8c] sm:$0xf]
    %v748 = vld [vmem:[%s7 + $0x90] sm:$0xf]
    %v749 = vld [vmem:[%s7 + $0x94] sm:$0xf]
    %v750 = vld [vmem:[%s7 + $0x98] sm:$0xf]
    %v751 = vld [vmem:[%s7 + $0x9c] sm:$0xf]
    %v752 = vld [vmem:[%s7 + $0xa0] sm:$0xf]
    %v753 = vld [vmem:[%s7 + $0xa4] sm:$0xf]
    %v754 = vld [vmem:[%s7 + $0xa8] sm:$0xf]
    %v755 = vld [vmem:[%s7 + $0xac] sm:$0xf]
    %v756 = vld [vmem:[%s7 + $0xb0] sm:$0xf]
    %v757 = vld [vmem:[%s7 + $0xb4] sm:$0xf]
    %v758 = vld [vmem:[%s7 + $0xb8] sm:$0xf]
    %v759 = vld [vmem:[%s7 + $0xbc] sm:$0xf]
    %v760 = vld [vmem:[%s7 + $0xc0] sm:$0xf]
    %v761 = vld [vmem:[%s7 + $0xc4] sm:$0xf]
    %v762 = vld [vmem:[%s7 + $0xc8] sm:$0xf]
    %v763 = vld [vmem:[%s7 + $0xcc] sm:$0xf]
    %v764 = vld [vmem:[%s7 + $0xd0] sm:$0xf]
    %v765 = vld [vmem:[%s7 + $0xd4] sm:$0xf]
    %v766 = vld [vmem:[%s7 + $0xd8] sm:$0xf]
    %v767 = vld [vmem:[%s7 + $0xdc] sm:$0xf]
    %v768 = vld [vmem:[%s7 + $0xe0] sm:$0xf]
    %v769 = vld [vmem:[%s7 + $0xe4] sm:$0xf]
    %v770 = vld [vmem:[%s7 + $0xe8] sm:$0xf]
    %v771 = vld [vmem:[%s7 + $0xec] sm:$0xf]
    %v772 = vld [vmem:[%s7 + $0xf0] sm:$0xf]
    %v773 = vld [vmem:[%s7 + $0xf4] sm:$0xf]
    %v774 = vld [vmem:[%s7 + $0xf8] sm:$0xf]
    %v775 = vld [vmem:[%s7 + $0xfc] sm:$0xf]
    %v776 = vld [vmem:[%s7 + $0x100] sm:$0xf]
    %v777 = vld [vmem:[%s7 + $0x104] sm:$0xf]
    %v778 = vld [vmem:[%s7 + $0x108] sm:$0xf]
    %v779 = vld [vmem:[%s7 + $0x10c] sm:$0xf]
    %v780 = vld [vmem:[%s7 + $0x110] sm:$0xf]
    %v781 = vld [vmem:[%s7 + $0x114] sm:$0xf]
    %v782 = vld [vmem:[%s7 + $0x118] sm:$0xf]
    %v783 = vld [vmem:[%s7 + $0x11c] sm:$0xf]
    %v784 = vld [vmem:[%s7 + $0x120] sm:$0xf]
    %v785 = vld [vmem:[%s7 + $0x124] sm:$0xf]
    %v786 = vld [vmem:[%s7 + $0x128] sm:$0xf]
    %v787 = vld [vmem:[%s7 + $0x12c] sm:$0xf]
    %v788 = vld [vmem:[%s7 + $0x130] sm:$0xf]
    %v789 = vld [vmem:[%s7 + $0x134] sm:$0xf]
    %v790 = vld [vmem:[%s7 + $0x138] sm:$0xf]
    %v791 = vld [vmem:[%s7 + $0x13c] sm:$0xf]
    %v792 = vld [vmem:[%s7 + $0x140] sm:$0xf]
    %v793 = vld [vmem:[%s7 + $0x144] sm:$0xf]
    %v794 = vld [vmem:[%s7 + $0x148] sm:$0xf]
    %v795 = vld [vmem:[%s7 + $0x14c] sm:$0xf]
    %v796 = vld [vmem:[%s7 + $0x150] sm:$0xf]
    %v797 = vld [vmem:[%s7 + $0x154] sm:$0xf]
    %v798 = vld [vmem:[%s7 + $0x158] sm:$0xf]
    %v799 = vld [vmem:[%s7 + $0x15c] sm:$0xf]
    %v800 = vld [vmem:[%s7 + $0x160] sm:$0xf]
    %v801 = vld [vmem:[%s7 + $0x164] sm:$0xf]
    %v802 = vld [vmem:[%s7 + $0x168] sm:$0xf]
    %v803 = vld [vmem:[%s7 + $0x16c] sm:$0xf]
    %v804 = vld [vmem:[%s7 + $0x170] sm:$0xf]
    %v805 = vld [vmem:[%s7 + $0x174] sm:$0xf]
    %v806 = vld [vmem:[%s7 + $0x178] sm:$0xf]
    %v807 = vld [vmem:[%s7 + $0x17c] sm:$0xf]
    %v808 = vld [vmem:[%s7 + $0x180] sm:$0xf]
    %v809 = vld [vmem:[%s7 + $0x184] sm:$0xf]
    %v810 = vld [vmem:[%s7 + $0x188] sm:$0xf]
    %v811 = vld [vmem:[%s7 + $0x18c] sm:$0xf]
    %v812 = vld [vmem:[%s7 + $0x190] sm:$0xf]
    %v813 = vld [vmem:[%s7 + $0x194] sm:$0xf]
    %v814 = vld [vmem:[%s7 + $0x198] sm:$0xf]
    %v815 = vld [vmem:[%s7 + $0x19c] sm:$0xf]
    %v816 = vld [vmem:[%s7 + $0x1a0] sm:$0xf]
    %v817 = vld [vmem:[%s7 + $0x1a4] sm:$0xf]
    %v818 = vld [vmem:[%s7 + $0x1a8] sm:$0xf]
    %v819 = vld [vmem:[%s7 + $0x1ac] sm:$0xf]
    %v820 = vld [vmem:[%s7 + $0x1b0] sm:$0xf]
    %v821 = vld [vmem:[%s7 + $0x1b4] sm:$0xf]
    %v822 = vld [vmem:[%s7 + $0x1b8] sm:$0xf]
    %v823 = vld [vmem:[%s7 + $0x1bc] sm:$0xf]
    %v824 = vld [vmem:[%s7 + $0x1c0] sm:$0xf]
    %v825 = vld [vmem:[%s7 + $0x1c4] sm:$0xf]
    %v826 = vld [vmem:[%s7 + $0x1c8] sm:$0xf]
    %v827 = vld [vmem:[%s7 + $0x1cc] sm:$0xf]
    %v828 = vld [vmem:[%s7 + $0x1d0] sm:$0xf]
    %v829 = vld [vmem:[%s7 + $0x1d4] sm:$0xf]
    %v830 = vld [vmem:[%s7 + $0x1d8] sm:$0xf]
    %v831 = vld [vmem:[%s7 + $0x1dc] sm:$0xf]
    %v832 = vld [vmem:[%s7 + $0x1e0] sm:$0xf]
    %v833 = vld [vmem:[%s7 + $0x1e4] sm:$0xf]
    %v834 = vld [vmem:[%s7 + $0x1e8] sm:$0xf]
    %v835 = vld [vmem:[%s7 + $0x1ec] sm:$0xf]
    %v836 = vld [vmem:[%s7 + $0x1f0] sm:$0xf]
    %v837 = vld [vmem:[%s7 + $0x1f4] sm:$0xf]
    %v838 = vld [vmem:[%s7 + $0x1f8] sm:$0xf]
    %v839 = vld [vmem:[%s7 + $0x1fc] sm:$0xf]
    %v968 = vunpack.c.l.b16 %v712
    %v969 = vunpack.c.l.b16 %v713
    %v970 = vunpack.c.l.b16 %v714
    %v971 = vunpack.c.l.b16 %v715
    %v972 = vunpack.c.l.b16 %v716
    %v973 = vunpack.c.l.b16 %v717
    %v974 = vunpack.c.l.b16 %v718
    %v975 = vunpack.c.l.b16 %v719
    %v976 = vunpack.c.l.b16 %v720
    %v977 = vunpack.c.l.b16 %v721
    %v978 = vunpack.c.l.b16 %v722
    %v979 = vunpack.c.l.b16 %v723
    %v980 = vunpack.c.l.b16 %v724
    %v981 = vunpack.c.l.b16 %v725
    %v982 = vunpack.c.l.b16 %v726
    %v983 = vunpack.c.l.b16 %v727
    %v984 = vunpack.c.l.b16 %v728
    %v985 = vunpack.c.l.b16 %v729
    %v986 = vunpack.c.l.b16 %v730
    %v987 = vunpack.c.l.b16 %v731
    %v988 = vunpack.c.l.b16 %v732
    %v989 = vunpack.c.l.b16 %v733
    %v990 = vunpack.c.l.b16 %v734
    %v991 = vunpack.c.l.b16 %v735
    %v992 = vunpack.c.l.b16 %v736
    %v993 = vunpack.c.l.b16 %v737
    %v994 = vunpack.c.l.b16 %v738
    %v995 = vunpack.c.l.b16 %v739
    %v996 = vunpack.c.l.b16 %v740
    %v997 = vunpack.c.l.b16 %v741
    %v998 = vunpack.c.l.b16 %v742
    %v999 = vunpack.c.l.b16 %v743
    %v1000 = vunpack.c.l.b16 %v744
    %v1001 = vunpack.c.l.b16 %v745
    %v1002 = vunpack.c.l.b16 %v746
    %v1003 = vunpack.c.l.b16 %v747
    %v1004 = vunpack.c.l.b16 %v748
    %v1005 = vunpack.c.l.b16 %v749
    %v1006 = vunpack.c.l.b16 %v750
    %v1007 = vunpack.c.l.b16 %v751
    %v1008 = vunpack.c.l.b16 %v752
    %v1009 = vunpack.c.l.b16 %v753
    %v1010 = vunpack.c.l.b16 %v754
    %v1011 = vunpack.c.l.b16 %v755
    %v1012 = vunpack.c.l.b16 %v756
    %v1013 = vunpack.c.l.b16 %v757
    %v1014 = vunpack.c.l.b16 %v758
    %v1015 = vunpack.c.l.b16 %v759
    %v1016 = vunpack.c.l.b16 %v760
    %v1017 = vunpack.c.l.b16 %v761
    %v1018 = vunpack.c.l.b16 %v762
    %v1019 = vunpack.c.l.b16 %v763
    %v1020 = vunpack.c.l.b16 %v764
    %v1021 = vunpack.c.l.b16 %v765
    %v1022 = vunpack.c.l.b16 %v766
    %v1023 = vunpack.c.l.b16 %v767
    %v1024 = vunpack.c.l.b16 %v768
    %v1025 = vunpack.c.l.b16 %v769
    %v1026 = vunpack.c.l.b16 %v770
    %v1027 = vunpack.c.l.b16 %v771
    %v1028 = vunpack.c.l.b16 %v772
    %v1029 = vunpack.c.l.b16 %v773
    %v1030 = vunpack.c.l.b16 %v774
    %v1031 = vunpack.c.l.b16 %v775
    %v1032 = vunpack.c.l.b16 %v776
    %v1033 = vunpack.c.l.b16 %v777
    %v1034 = vunpack.c.l.b16 %v778
    %v1035 = vunpack.c.l.b16 %v779
    %v1036 = vunpack.c.l.b16 %v780
    %v1037 = vunpack.c.l.b16 %v781
    %v1038 = vunpack.c.l.b16 %v782
    %v1039 = vunpack.c.l.b16 %v783
    %v1040 = vunpack.c.l.b16 %v784
    %v1041 = vunpack.c.l.b16 %v785
    %v1042 = vunpack.c.l.b16 %v786
    %v1043 = vunpack.c.l.b16 %v787
    %v1044 = vunpack.c.l.b16 %v788
    %v1045 = vunpack.c.l.b16 %v789
    %v1046 = vunpack.c.l.b16 %v790
    %v1047 = vunpack.c.l.b16 %v791
    %v1048 = vunpack.c.l.b16 %v792
    %v1049 = vunpack.c.l.b16 %v793
    %v1050 = vunpack.c.l.b16 %v794
    %v1051 = vunpack.c.l.b16 %v795
    %v1052 = vunpack.c.l.b16 %v796
    %v1053 = vunpack.c.l.b16 %v797
    %v1054 = vunpack.c.l.b16 %v798
    %v1055 = vunpack.c.l.b16 %v799
    %v1056 = vunpack.c.l.b16 %v800
    %v1057 = vunpack.c.l.b16 %v801
    %v1058 = vunpack.c.l.b16 %v802
    %v1059 = vunpack.c.l.b16 %v803
    %v1060 = vunpack.c.l.b16 %v804
    %v1061 = vunpack.c.l.b16 %v805
    %v1062 = vunpack.c.l.b16 %v806
    %v1063 = vunpack.c.l.b16 %v807
    %v1064 = vunpack.c.l.b16 %v808
    %v1065 = vunpack.c.l.b16 %v809
    %v1066 = vunpack.c.l.b16 %v810
    %v1067 = vunpack.c.l.b16 %v811
    %v1068 = vunpack.c.l.b16 %v812
    %v1069 = vunpack.c.l.b16 %v813
    %v1070 = vunpack.c.l.b16 %v814
    %v1071 = vunpack.c.l.b16 %v815
    %v1072 = vunpack.c.l.b16 %v816
    %v1073 = vunpack.c.l.b16 %v817
    %v1074 = vunpack.c.l.b16 %v818
    %v1075 = vunpack.c.l.b16 %v819
    %v1076 = vunpack.c.l.b16 %v820
    %v1077 = vunpack.c.l.b16 %v821
    %v1078 = vunpack.c.l.b16 %v822
    %v1079 = vunpack.c.l.b16 %v823
    %v1080 = vunpack.c.l.b16 %v824
    %v1081 = vunpack.c.l.b16 %v825
    %v1082 = vunpack.c.l.b16 %v826
    %v1083 = vunpack.c.l.b16 %v827
    %v1084 = vunpack.c.l.b16 %v828
    %v1085 = vunpack.c.l.b16 %v829
    %v1086 = vunpack.c.l.b16 %v830
    %v1087 = vunpack.c.l.b16 %v831
    %v1088 = vunpack.c.l.b16 %v832
    %v1089 = vunpack.c.l.b16 %v833
    %v1090 = vunpack.c.l.b16 %v834
    %v1091 = vunpack.c.l.b16 %v835
    %v1092 = vunpack.c.l.b16 %v836
    %v1093 = vunpack.c.l.b16 %v837
    %v1094 = vunpack.c.l.b16 %v838
    %v1095 = vunpack.c.l.b16 %v839
    %v1096 = vpack.c.b16 %v969, %v968
    %v1097 = vpack.c.b16 %v971, %v970
    %v1098 = vpack.c.b16 %v973, %v972
    %v1099 = vpack.c.b16 %v975, %v974
    %v1100 = vpack.c.b16 %v977, %v976
    %v1101 = vpack.c.b16 %v979, %v978
    %v1102 = vpack.c.b16 %v981, %v980
    %v1103 = vpack.c.b16 %v983, %v982
    %v1104 = vpack.c.b16 %v985, %v984
    %v1105 = vpack.c.b16 %v987, %v986
    %v1106 = vpack.c.b16 %v989, %v988
    %v1107 = vpack.c.b16 %v991, %v990
    %v1108 = vpack.c.b16 %v993, %v992
    %v1109 = vpack.c.b16 %v995, %v994
    %v1110 = vpack.c.b16 %v997, %v996
    %v1111 = vpack.c.b16 %v999, %v998
    %v1112 = vpack.c.b16 %v1001, %v1000
    %v1113 = vpack.c.b16 %v1003, %v1002
    %v1114 = vpack.c.b16 %v1005, %v1004
    %v1115 = vpack.c.b16 %v1007, %v1006
    %v1116 = vpack.c.b16 %v1009, %v1008
    %v1117 = vpack.c.b16 %v1011, %v1010
    %v1118 = vpack.c.b16 %v1013, %v1012
    %v1119 = vpack.c.b16 %v1015, %v1014
    %v1120 = vpack.c.b16 %v1017, %v1016
    %v1121 = vpack.c.b16 %v1019, %v1018
    %v1122 = vpack.c.b16 %v1021, %v1020
    %v1123 = vpack.c.b16 %v1023, %v1022
    %v1124 = vpack.c.b16 %v1025, %v1024
    %v1125 = vpack.c.b16 %v1027, %v1026
    %v1126 = vpack.c.b16 %v1029, %v1028
    %v1127 = vpack.c.b16 %v1031, %v1030
    %v1128 = vpack.c.b16 %v1033, %v1032
    %v1129 = vpack.c.b16 %v1035, %v1034
    %v1130 = vpack.c.b16 %v1037, %v1036
    %v1131 = vpack.c.b16 %v1039, %v1038
    %v1132 = vpack.c.b16 %v1041, %v1040
    %v1133 = vpack.c.b16 %v1043, %v1042
    %v1134 = vpack.c.b16 %v1045, %v1044
    %v1135 = vpack.c.b16 %v1047, %v1046
    %v1136 = vpack.c.b16 %v1049, %v1048
    %v1137 = vpack.c.b16 %v1051, %v1050
    %v1138 = vpack.c.b16 %v1053, %v1052
    %v1139 = vpack.c.b16 %v1055, %v1054
    %v1140 = vpack.c.b16 %v1057, %v1056
    %v1141 = vpack.c.b16 %v1059, %v1058
    %v1142 = vpack.c.b16 %v1061, %v1060
    %v1143 = vpack.c.b16 %v1063, %v1062
    %v1144 = vpack.c.b16 %v1065, %v1064
    %v1145 = vpack.c.b16 %v1067, %v1066
    %v1146 = vpack.c.b16 %v1069, %v1068
    %v1147 = vpack.c.b16 %v1071, %v1070
    %v1148 = vpack.c.b16 %v1073, %v1072
    %v1149 = vpack.c.b16 %v1075, %v1074
    %v1150 = vpack.c.b16 %v1077, %v1076
    %v1151 = vpack.c.b16 %v1079, %v1078
    %v1152 = vpack.c.b16 %v1081, %v1080
    %v1153 = vpack.c.b16 %v1083, %v1082
    %v1154 = vpack.c.b16 %v1085, %v1084
    %v1155 = vpack.c.b16 %v1087, %v1086
    %v1156 = vpack.c.b16 %v1089, %v1088
    %v1157 = vpack.c.b16 %v1091, %v1090
    %v1158 = vpack.c.b16 %v1093, %v1092
    %v1159 = vpack.c.b16 %v1095, %v1094
    %1224 = vmatpush.bf16.msra.mxu0 %v1103
    %1225 = vmatpush.bf16.msra.mxu0 %v1102
    %1226 = vmatpush.bf16.msra.mxu0 %v1101
    %1227 = vmatpush.bf16.msra.mxu0 %v1100
    %1228 = vmatpush.bf16.msra.mxu0 %v1099
    %1229 = vmatpush.bf16.msra.mxu0 %v1098
    %1230 = vmatpush.bf16.msra.mxu0 %v1097
    %1231 = vmatpush.bf16.msra.mxu0 %v1096
    %1232 = vmatmul.bf16.gmra.mxu0 %v704
    %v1233 = vpop.f32.mrf.mxu0
    %v1234 = vadd.f32 0.0, %v1233
    %v1235 = vpop.f32.mrf.mxu0
    %1236 = vdwg.mxu0
    %1237 = vmatpush.bf16.msra.mxu0 %v1111
    %1238 = vmatpush.bf16.msra.mxu0 %v1110
    %1239 = vmatpush.bf16.msra.mxu0 %v1109
    %1240 = vmatpush.bf16.msra.mxu0 %v1108
    %1241 = vmatpush.bf16.msra.mxu0 %v1107
    %1242 = vmatpush.bf16.msra.mxu0 %v1106
    %1243 = vmatpush.bf16.msra.mxu0 %v1105
    %1244 = vmatpush.bf16.msra.mxu0 %v1104
    %1245 = vmatmul.bf16.gmra.mxu0 %v705
    %v1246 = vpop.f32.mrf.mxu0
    %v1247 = vadd.f32 %v1234, %v1246
    %v1248 = vpop.f32.mrf.mxu0
    %1249 = vdwg.mxu0
    %1250 = vmatpush.bf16.msra.mxu0 %v1119
    %1251 = vmatpush.bf16.msra.mxu0 %v1118
    %1252 = vmatpush.bf16.msra.mxu0 %v1117
    %1253 = vmatpush.bf16.msra.mxu0 %v1116
    %1254 = vmatpush.bf16.msra.mxu0 %v1115
    %1255 = vmatpush.bf16.msra.mxu0 %v1114
    %1256 = vmatpush.bf16.msra.mxu0 %v1113
    %1257 = vmatpush.bf16.msra.mxu0 %v1112
    %1258 = vmatmul.bf16.gmra.mxu0 %v706
    %v1259 = vpop.f32.mrf.mxu0
    %v1260 = vadd.f32 %v1247, %v1259
    %v1261 = vpop.f32.mrf.mxu0
    %1262 = vdwg.mxu0
    %1263 = vmatpush.bf16.msra.mxu0 %v1127
    %1264 = vmatpush.bf16.msra.mxu0 %v1126
    %1265 = vmatpush.bf16.msra.mxu0 %v1125
    %1266 = vmatpush.bf16.msra.mxu0 %v1124
    %1267 = vmatpush.bf16.msra.mxu0 %v1123
    %1268 = vmatpush.bf16.msra.mxu0 %v1122
    %1269 = vmatpush.bf16.msra.mxu0 %v1121
    %1270 = vmatpush.bf16.msra.mxu0 %v1120
    %1271 = vmatmul.bf16.gmra.mxu0 %v707
    %v1272 = vpop.f32.mrf.mxu0
    %v1273 = vadd.f32 %v1260, %v1272
    %v1274 = vpop.f32.mrf.mxu0
    %1275 = vdwg.mxu0
    %1276 = vmatpush.bf16.msra.mxu0 %v1135
    %1277 = vmatpush.bf16.msra.mxu0 %v1134
    %1278 = vmatpush.bf16.msra.mxu0 %v1133
    %1279 = vmatpush.bf16.msra.mxu0 %v1132
    %1280 = vmatpush.bf16.msra.mxu0 %v1131
    %1281 = vmatpush.bf16.msra.mxu0 %v1130
    %1282 = vmatpush.bf16.msra.mxu0 %v1129
    %1283 = vmatpush.bf16.msra.mxu0 %v1128
    %1284 = vmatmul.bf16.gmra.mxu0 %v708
    %v1285 = vpop.f32.mrf.mxu0
    %v1286 = vadd.f32 %v1273, %v1285
    %v1287 = vpop.f32.mrf.mxu0
    %1288 = vdwg.mxu0
    %1289 = vmatpush.bf16.msra.mxu0 %v1143
    %1290 = vmatpush.bf16.msra.mxu0 %v1142
    %1291 = vmatpush.bf16.msra.mxu0 %v1141
    %1292 = vmatpush.bf16.msra.mxu0 %v1140
    %1293 = vmatpush.bf16.msra.mxu0 %v1139
    %1294 = vmatpush.bf16.msra.mxu0 %v1138
    %1295 = vmatpush.bf16.msra.mxu0 %v1137
    %1296 = vmatpush.bf16.msra.mxu0 %v1136
    %1297 = vmatmul.bf16.gmra.mxu0 %v709
    %v1298 = vpop.f32.mrf.mxu0
    %v1299 = vadd.f32 %v1286, %v1298
    %v1300 = vpop.f32.mrf.mxu0
    %1301 = vdwg.mxu0
    %1302 = vmatpush.bf16.msra.mxu0 %v1151
    %1303 = vmatpush.bf16.msra.mxu0 %v1150
    %1304 = vmatpush.bf16.msra.mxu0 %v1149
    %1305 = vmatpush.bf16.msra.mxu0 %v1148
    %1306 = vmatpush.bf16.msra.mxu0 %v1147
    %1307 = vmatpush.bf16.msra.mxu0 %v1146
    %1308 = vmatpush.bf16.msra.mxu0 %v1145
    %1309 = vmatpush.bf16.msra.mxu0 %v1144
    %1310 = vmatmul.bf16.gmra.mxu0 %v710
    %v1311 = vpop.f32.mrf.mxu0
    %v1312 = vadd.f32 %v1299, %v1311
    %v1313 = vpop.f32.mrf.mxu0
    %1314 = vdwg.mxu0
    %1315 = vmatpush.bf16.msra.mxu0 %v1159
    %1316 = vmatpush.bf16.msra.mxu0 %v1158
    %1317 = vmatpush.bf16.msra.mxu0 %v1157
    %1318 = vmatpush.bf16.msra.mxu0 %v1156
    %1319 = vmatpush.bf16.msra.mxu0 %v1155
    %1320 = vmatpush.bf16.msra.mxu0 %v1154
    %1321 = vmatpush.bf16.msra.mxu0 %v1153
    %1322 = vmatpush.bf16.msra.mxu0 %v1152
    %1323 = vmatmul.bf16.gmra.mxu0 %v711
    %v1324 = vpop.f32.mrf.mxu0
    %v1325 = vadd.f32 %v1312, %v1324
    %v1326 = vpop.f32.mrf.mxu0
    %1327 = vdwg.mxu0
    %v1328 = vadd.f32 %v703, %v1325
    %vm1329 = vcmask 254976
    %1330 = vst.msk [vmem:[#allocation4] sm:$0x3] %vm1329, %v1328
    // Predicated region
    $region58: #{perceiver_io_forward.3} parent=1 // pred_check
      %p1331 = pneg %p46
    $region59: #{perceiver_io_forward.3} parent=1 // pred_check_branch
      %1333 = sbr.rel (%p1331) target = $region61
    $region60: #{perceiver_io_forward.3} parent=1 // pred_region
      %v1334 = vld [vmem:[#allocation4] sm:$0x3]
      %v1335 = vld [vmem:[%s8] sm:$0x1]
      %v1337 = vperm.slane %v1335, 0
      %v1339 = vadd.f32 %v1334, %v1337
      %v1340 = vld [vmem:[#allocation2] sm:$0x3]
      %v1341 = vadd.f32 %v1340, %v1339
      %v1342 = vld [vmem:[%s9] sm:$0x1]
      %v1343 = vld [vmem:[%s10] sm:$0x1]
      %v1344 = vsel %vm1329, %v1341, 0.0
      %1345 = vadd.xlane.f32.xlu0 %v1344
      %v1346 = vpop.xlane.xlu0 %1345
      %v1347 = vrcp.pop 32.0
      %v1348 = vmul.f32 32.0, %v1347
      %v1349 = vsub.f32 1.0, %v1348
      %v1350 = vmul.f32 %v1347, %v1349
      %v1351 = vadd.f32 %v1347, %v1350
      %vm1352 = vweird.f32 %v1347
      %v1353 = vsel %vm1352, %v1347, %v1351
      %v1354 = vmul.f32 %v1346, %v1353
      %v1355 = vsub.f32 %v1341, %v1354
      %v1356 = vmul.f32 %v1355, %v1355
      %v1357 = vsel %vm1329, %v1356, 0.0
      %1358 = vadd.xlane.f32.xlu0 %v1357
      %v1359 = vpop.xlane.xlu0 %1358
      %v1360 = vmul.f32 %v1359, %v1353
      %v1361 = vadd.f32 %v1360, 1e-05
      %v1362 = vrsqrt.pop %v1361
      %v1363 = vmul.f32 %v1362, %v1361
      %v1364 = vmul.f32 %v1363, %v1362
      %v1365 = vmul.f32 0.5, %v1364
      %v1366 = vsub.f32 1.5, %v1365
      %v1367 = vmul.f32 %v1362, %v1366
      %vm1368 = vweird.f32 %v1361
      %vm1369 = vweird.f32 %v1362
      %vm1370 = vmor %vm1368, %vm1369
      %v1371 = vsel %vm1370, %v1362, %v1367
      %v1372 = vmul.f32 %v1355, %v1371
      %v1374 = vperm.slane %v1342, 0
      %v1376 = vmul.f32 %v1372, %v1374
      %v1378 = vperm.slane %v1343, 0
      %v1380 = vadd.f32 %v1376, %v1378
      %v1381 = vpack.c.bf16 %v1380, %v1380
      %v1382 = vld [vmem:[%s11] sm:$0xf]
      %v1383 = vld [vmem:[%s11 + $0x4] sm:$0xf]
      %v1384 = vld [vmem:[%s11 + $0x8] sm:$0xf]
      %v1385 = vld [vmem:[%s11 + $0xc] sm:$0xf]
      %v1386 = vld [vmem:[%s12] sm:$0x1]
      %v1388 = vperm.slane %v1386, 0
      %v1394 = vunpack.c.l.b16 %v1382
      %v1395 = vunpack.c.l.b16 %v1383
      %v1396 = vunpack.c.l.b16 %v1384
      %v1397 = vunpack.c.l.b16 %v1385
      %v1398 = vpack.c.b16 %v1395, %v1394
      %v1399 = vpack.c.b16 %v1397, %v1396
      %v1403 = vsel %vm243, %v1381, 0
      %1405 = vmatpush.bf16.msra.mxu0 0
      %1406 = vmatpush.bf16.msra.mxu0 0
      %1407 = vmatpush.bf16.msra.mxu0 0
      %1408 = vmatpush.bf16.msra.mxu0 0
      %1409 = vmatpush.bf16.msra.mxu0 0
      %1410 = vmatpush.bf16.msra.mxu0 0
      %1411 = vmatpush.bf16.msra.mxu0 %v1399
      %1412 = vmatpush.bf16.msra.mxu0 %v1398
      %1413 = vmatmul.bf16.gmra.mxu0 %v1403
      %v1414 = vpop.f32.mrf.mxu0
      %v1415 = vadd.f32 %v1388, %v1414
      %v1416 = vpop.f32.mrf.mxu0
      %1417 = vdwg.mxu0
      %1418 = vst [vmem:[#allocation5] sm:$0x3] %v1415
    $region61: #{perceiver_io_forward.3} parent=1 // pred_fallthru
      _
    // Predicated region
    $region62: #{perceiver_io_forward.3} parent=1 // pred_check
      _
    $region63: #{perceiver_io_forward.3} parent=1 // pred_check_branch
      %1420 = sbr.rel (0) target = $region65
    $region64: #{perceiver_io_forward.3} parent=1 // pred_region
      %1422 = vsyncadd [#allocation6], 0
      %s1424 = sshll.u32 [#allocation5], 4
      %s1425 = int_to_ptr.vmem [resolvable:$true] %s1424
      %s1426 = sshll.u32 %s13, 4
      %s1427 = int_to_ptr.hbm [resolvable:$true] %s1426
      %1429 = dma.vmem_to_hbm [thread:$0]  %s1425, 32, %s1427, [#allocation6]
    $region65: #{perceiver_io_forward.3} parent=1 // pred_fallthru
      _
    // Predicated region
    $region66: #{perceiver_io_forward.3} parent=1 // pred_check
      _
    $region67: #{perceiver_io_forward.3} parent=1 // pred_check_branch
      %1431 = sbr.rel (0) target = $region69
    $region68: #{perceiver_io_forward.3} parent=1 // pred_region
      %1433 = dma.done [#allocation6], 32
    $region69: #{perceiver_io_forward.3} parent=1 // pred_fallthru
      _
    %1434 = vsyncpa [#allocation6], 1

</llo_original>
